<compile_context>
chip_gen: v5e
topology: v5e:2x2
jax: 0.10.0
libtpu: 0.0.40
codegen_flags: <defaults>
</compile_context>

<pallas_src>
import functools
import math

import jax
import jax.numpy as jnp
from jax.experimental import pallas as pl
from jax.experimental.pallas import tpu as pltpu


def _round_up(x, m):
    return ((x + m - 1) // m) * m


def _round_down_128(x):
    return max(128, (x // 128) * 128)


def proj_kernel(x_ref, wn_ref, ws_ref, b_ref, xw_ref, xself_ref):
    """Per row-tile node-feature projections.

    x_ref     : (TP, Fin_p)      bf16
    wn_ref    : (Fin_p, Fout_p)  bf16   W_neigh
    ws_ref    : (Fin_p, Fout_p)  bf16   W_self
    b_ref     : (1, Fout_p)      f32    bias
    xw_ref    : (TP, Fout_p)     bf16   x @ W_neigh      (fed to the adjacency reduction)
    xself_ref : (TP, Fout_p)     f32    x @ W_self + b   (seeds the output accumulator)
    """
    x = x_ref[...]
    xw_ref[...] = jnp.dot(x, wn_ref[...],
                          preferred_element_type=jnp.float32).astype(xw_ref.dtype)
    xself_ref[...] = jnp.dot(x, ws_ref[...],
                             preferred_element_type=jnp.float32) + b_ref[...]


def agg_kernel(adj_ref, xw_ref, xself_ref, out_ref):
    """(row tile i, reduction tile k): out[i] = xself[i] + sum_k adj[i,k] @ xw[k].

    adj_ref   : (TM, TK)       bf16  row-normalized adjacency tile
    xw_ref    : (TK, Fout_p)   bf16  projected neighbor features of node tile k
    xself_ref : (TM, Fout_p)   f32   projected self features + bias of node tile i
    out_ref   : (TM, Fout_p)   f32   resident accumulator (same block across all k)
    """
    k = pl.program_id(1)

    @pl.when(k == 0)
    def _init():
        out_ref[...] = xself_ref[...]

    out_ref[...] += jnp.dot(adj_ref[...], xw_ref[...],
                            preferred_element_type=jnp.float32)


def _compiler_params(dimension_semantics, block_bytes):
    # Derive the VMEM limit from the real block footprint; cap well under v7x's
    # 64 MiB physical VMEM so the compiler keeps headroom for internal scratch.
    limit = int(min(44 << 20, max(block_bytes + (8 << 20), 16 << 20)))
    return pltpu.CompilerParams(dimension_semantics=dimension_semantics,
                                vmem_limit_bytes=limit)


@functools.partial(jax.jit, static_argnames=("tm", "tk"))
def sage_layer_pallas(adj_norm, x, w_fc, b_fc, *, tm=256, tk=512):
    """SAGELayer forward.

    adj_norm : (N, N)        f32  row-normalized dense adjacency (MeanAggregator spmm matrix)
    x        : (N, Fin)      f32  node features
    w_fc     : (Fout, 2*Fin) f32  nn.Linear(2*Fin, Fout).weight  ([W_self | W_neigh])
    b_fc     : (Fout,)       f32  nn.Linear bias
    """
    N, Fin = x.shape
    Fout = w_fc.shape[0]

    # Lane-dense feature padding.
    Fin_p = _round_up(Fin, 128)
    Fout_p = _round_up(Fout, 128)

    # ---- tile selection -----------------------------------------------------
    n128 = _round_up(N, 128)
    tm = _round_down_128(min(tm, n128))
    tk = _round_down_128(min(tk, n128))

    def _agg_vmem(tm_, tk_):
        # double-buffered adj / xw / xself input blocks + double-buffered f32 out block
        return 2 * (tm_ * tk_ * 2 + tk_ * Fout_p * 2
                    + tm_ * Fout_p * 4 + tm_ * Fout_p * 4)

    budget = 36 << 20  # v7x-safe working-set budget
    while _agg_vmem(tm, tk) > budget and tk > 128:
        tk = _round_down_128(tk // 2)
    while _agg_vmem(tm, tk) > budget and tm > 128:
        tm = _round_down_128(tm // 2)

    # tm and tk are tuned independently -> pad N to a common multiple (lcm, not max).
    N_p = _round_up(N, math.lcm(tm, tk))

    # ---- operand prep (bf16 streams, zero padding keeps real rows/cols exact) ----
    adj_p = jnp.pad(adj_norm.astype(jnp.bfloat16), ((0, N_p - N), (0, N_p - N)))
    x_p = jnp.pad(x.astype(jnp.bfloat16), ((0, N_p - N), (0, Fin_p - Fin)))

    # nn.Linear(2*Fin, Fout) weight columns are [W_self | W_neigh], matching
    # torch.cat([x, agg], dim=-1).
    w_self = w_fc[:, :Fin].T.astype(jnp.bfloat16)     # (Fin, Fout)
    w_neigh = w_fc[:, Fin:].T.astype(jnp.bfloat16)    # (Fin, Fout)
    ws_p = jnp.pad(w_self, ((0, Fin_p - Fin), (0, Fout_p - Fout)))
    wn_p = jnp.pad(w_neigh, ((0, Fin_p - Fin), (0, Fout_p - Fout)))
    b_p = jnp.pad(b_fc.astype(jnp.float32), (0, Fout_p - Fout)).reshape(1, Fout_p)

    # ---- kernel 1: feature projections (small, O(N*Fin*Fout)) ----------------
    tp = tm  # N_p % tm == 0
    proj_bytes = 2 * (tp * Fin_p * 2 + 2 * Fin_p * Fout_p * 2 + Fout_p * 4
                      + tp * Fout_p * 2 + tp * Fout_p * 4)
    xw, xself = pl.pallas_call(
        proj_kernel,
        out_shape=(jax.ShapeDtypeStruct((N_p, Fout_p), jnp.bfloat16),
                   jax.ShapeDtypeStruct((N_p, Fout_p), jnp.float32)),
        grid_spec=pltpu.PrefetchScalarGridSpec(
            num_scalar_prefetch=0,
            grid=(N_p // tp,),
            in_specs=[
                pl.BlockSpec((tp, Fin_p), lambda i: (i, 0)),        # x row tile
                pl.BlockSpec((Fin_p, Fout_p), lambda i: (0, 0)),    # W_neigh
                pl.BlockSpec((Fin_p, Fout_p), lambda i: (0, 0)),    # W_self
                pl.BlockSpec((1, Fout_p), lambda i: (0, 0)),        # bias
            ],
            out_specs=[
                pl.BlockSpec((tp, Fout_p), lambda i: (i, 0)),       # xw
                pl.BlockSpec((tp, Fout_p), lambda i: (i, 0)),       # xself
            ],
        ),
        compiler_params=_compiler_params(("parallel",), proj_bytes),
    )(x_p, wn_p, ws_p, b_p)

    # ---- kernel 2: adjacency reduction (HBM-bandwidth bound, O(N^2*Fout)) ----
    out_p = pl.pallas_call(
        agg_kernel,
        out_shape=jax.ShapeDtypeStruct((N_p, Fout_p), jnp.float32),
        grid_spec=pltpu.PrefetchScalarGridSpec(
            num_scalar_prefetch=0,
            grid=(N_p // tm, N_p // tk),
            in_specs=[
                pl.BlockSpec((tm, tk), lambda i, k: (i, k)),        # adj tile
                pl.BlockSpec((tk, Fout_p), lambda i, k: (k, 0)),    # xw[k]
                pl.BlockSpec((tm, Fout_p), lambda i, k: (i, 0)),    # xself[i]
            ],
            out_specs=pl.BlockSpec((tm, Fout_p), lambda i, k: (i, 0)),
        ),
        compiler_params=_compiler_params(("parallel", "arbitrary"),
                                         _agg_vmem(tm, tk)),
    )(adj_p, xw, xself)

    return out_p[:N, :Fout]


def sage_layer_ref_f32(adj_norm, x, w_fc, b_fc):
    """Pure-JAX f32 reference mirroring the PyTorch forward."""
    agg = adj_norm @ x
    cat = jnp.concatenate([x, agg], axis=-1)
    return cat @ w_fc.T + b_fc


def sage_layer_ref_bf16(adj_norm, x, w_fc, b_fc):
    """Reference with the same bf16/f32 casts and reassociated order as the kernel."""
    Fin = x.shape[1]
    adj_b = adj_norm.astype(jnp.bfloat16)
    x_b = x.astype(jnp.bfloat16)
    ws_b = w_fc[:, :Fin].T.astype(jnp.bfloat16)
    wn_b = w_fc[:, Fin:].T.astype(jnp.bfloat16)
    xw = jnp.dot(x_b, wn_b, preferred_element_type=jnp.float32).astype(jnp.bfloat16)
    xself = jnp.dot(x_b, ws_b, preferred_element_type=jnp.float32) + b_fc
    return xself + jnp.dot(adj_b, xw, preferred_element_type=jnp.float32)


if __name__ == "__main__":
    key = jax.random.PRNGKey(0)
    k_adj, k_x, k_w, k_b = jax.random.split(key, 4)

    num_nodes = 1024
    in_feats = 96
    out_feats = 64

    # Deterministic synthetic graph: random adjacency with self-loops,
    # row-normalized (MeanAggregator / graph.row_norm()).
    adj = (jax.random.uniform(k_adj, (num_nodes, num_nodes)) < 0.05).astype(jnp.float32)
    adj = jnp.maximum(adj, jnp.eye(num_nodes, dtype=jnp.float32))   # self-loop -> deg >= 1
    deg = adj.sum(axis=1, keepdims=True)
    adj_norm = adj / jnp.where(deg > 0, deg, 1.0)

    # Node features.
    x = jax.random.normal(k_x, (num_nodes, in_feats), dtype=jnp.float32)

    # fc = nn.Linear(2*in_feats, out_feats): weight (Fout, 2*Fin), bias (Fout,)
    bound = 1.0 / (2.0 * in_feats) ** 0.5
    w_fc = jax.random.uniform(k_w, (out_feats, 2 * in_feats),
                              minval=-bound, maxval=bound, dtype=jnp.float32)
    b_fc = jax.random.uniform(k_b, (out_feats,),
                              minval=-bound, maxval=bound, dtype=jnp.float32)

    out = sage_layer_pallas(adj_norm, x, w_fc, b_fc)
    out = jax.block_until_ready(out)
    assert out.shape == (num_nodes, out_feats)

    # Tight check against a reference with identical bf16/f32 casting and ordering.
    ref_bf16 = sage_layer_ref_bf16(adj_norm, x, w_fc, b_fc)
    assert jnp.allclose(out, ref_bf16, atol=2e-2, rtol=2e-2), "mismatch vs bf16 reference"

    # Loose sanity check against the full-f32 PyTorch-equivalent forward.
    ref_f32 = sage_layer_ref_f32(adj_norm, x, w_fc, b_fc)
    assert jnp.allclose(out, ref_f32, atol=6e-2, rtol=6e-2), "mismatch vs f32 reference"

    print("KERNEL_OK")
</pallas_src>

<mosaic_0001>
module attributes {stable_mosaic.version = 11 : i64} {
  func.func @proj_kernel(%arg0: i32, %arg1: memref<256x128xbf16, #tpu.memory_space<vmem>>, %arg2: memref<128x128xbf16, #tpu.memory_space<vmem>>, %arg3: memref<128x128xbf16, #tpu.memory_space<vmem>>, %arg4: memref<1x128xf32, #tpu.memory_space<vmem>>, %arg5: memref<256x128xbf16, #tpu.memory_space<vmem>>, %arg6: memref<256x128xf32, #tpu.memory_space<vmem>>) attributes {dimension_semantics = [#tpu.dimension_semantics<parallel>], iteration_bounds = array<i64: 4>, scalar_prefetch = 0 : i64, scratch_operands = 0 : i64, tpu.core_type = #tpu.core_type<tc>, window_params = [{transform_indices = @transform_0, window_bounds = array<i64: 256, 128>}, {pipeline_mode = #tpu.pipeline_mode<synchronous>, transform_indices = @transform_1, window_bounds = array<i64: 128, 128>}, {pipeline_mode = #tpu.pipeline_mode<synchronous>, transform_indices = @transform_2, window_bounds = array<i64: 128, 128>}, {pipeline_mode = #tpu.pipeline_mode<synchronous>, transform_indices = @transform_3, window_bounds = array<i64: 1, 128>}, {transform_indices = @transform_4, window_bounds = array<i64: 256, 128>}, {transform_indices = @transform_5, window_bounds = array<i64: 256, 128>}]} {
    %c0 = arith.constant 0 : index
    %c0_0 = arith.constant 0 : index
    %0 = vector.load %arg1[%c0, %c0_0] : memref<256x128xbf16, #tpu.memory_space<vmem>>, vector<256x128xbf16>
    %c0_1 = arith.constant 0 : index
    %c0_2 = arith.constant 0 : index
    %1 = vector.load %arg2[%c0_1, %c0_2] : memref<128x128xbf16, #tpu.memory_space<vmem>>, vector<128x128xbf16>
    %cst = arith.constant dense<0.000000e+00> : vector<256x128xf32>
    %2 = tpu.matmul %0, %1, %cst {dimension_numbers = #tpu.dot_dimension_numbers<[1], [0], [0], [1], [0, 0, 1, 1], [], []>} : vector<256x128xbf16>, vector<128x128xbf16>, vector<256x128xf32> -> vector<256x128xf32>
    %3 = arith.truncf %2 : vector<256x128xf32> to vector<256x128xbf16>
    %c0_3 = arith.constant 0 : index
    %c0_4 = arith.constant 0 : index
    %4 = vector.load %arg5[%c0_3, %c0_4] : memref<256x128xbf16, #tpu.memory_space<vmem>>, vector<256x128xbf16>
    tpu.vector_store %arg5[%c0_3, %c0_4], %3 {strides = array<i32>} : memref<256x128xbf16, #tpu.memory_space<vmem>>, vector<256x128xbf16>,
    %c0_5 = arith.constant 0 : index
    %c0_6 = arith.constant 0 : index
    %5 = vector.load %arg3[%c0_5, %c0_6] : memref<128x128xbf16, #tpu.memory_space<vmem>>, vector<128x128xbf16>
    %cst_7 = arith.constant dense<0.000000e+00> : vector<256x128xf32>
    %6 = tpu.matmul %0, %5, %cst_7 {dimension_numbers = #tpu.dot_dimension_numbers<[1], [0], [0], [1], [0, 0, 1, 1], [], []>} : vector<256x128xbf16>, vector<128x128xbf16>, vector<256x128xf32> -> vector<256x128xf32>
    %c0_8 = arith.constant 0 : index
    %c0_9 = arith.constant 0 : index
    %7 = vector.load %arg4[%c0_8, %c0_9] : memref<1x128xf32, #tpu.memory_space<vmem>>, vector<1x128xf32>
    %8 = vector.broadcast %7 : vector<1x128xf32> to vector<256x128xf32>
    %9 = arith.addf %6, %8 : vector<256x128xf32>
    %c0_10 = arith.constant 0 : index
    %c0_11 = arith.constant 0 : index
    %10 = vector.load %arg6[%c0_10, %c0_11] : memref<256x128xf32, #tpu.memory_space<vmem>>, vector<256x128xf32>
    tpu.vector_store %arg6[%c0_10, %c0_11], %9 {strides = array<i32>} : memref<256x128xf32, #tpu.memory_space<vmem>>, vector<256x128xf32>,
    return
  }
  func.func @transform_0(%arg0: i32) -> (i32, i32) {
    %c0_i32 = arith.constant 0 : i32
    %c0_i32_0 = arith.constant 0 : i32
    return %arg0, %c0_i32 : i32, i32
  }
  func.func @transform_1(%arg0: i32) -> (i32, i32) {
    %c0_i32 = arith.constant 0 : i32
    %c0_i32_0 = arith.constant 0 : i32
    %c0_i32_1 = arith.constant 0 : i32
    return %c0_i32, %c0_i32_0 : i32, i32
  }
  func.func @transform_2(%arg0: i32) -> (i32, i32) {
    %c0_i32 = arith.constant 0 : i32
    %c0_i32_0 = arith.constant 0 : i32
    %c0_i32_1 = arith.constant 0 : i32
    return %c0_i32, %c0_i32_0 : i32, i32
  }
  func.func @transform_3(%arg0: i32) -> (i32, i32) {
    %c0_i32 = arith.constant 0 : i32
    %c0_i32_0 = arith.constant 0 : i32
    %c0_i32_1 = arith.constant 0 : i32
    return %c0_i32, %c0_i32_0 : i32, i32
  }
  func.func @transform_4(%arg0: i32) -> (i32, i32) {
    %c0_i32 = arith.constant 0 : i32
    %c0_i32_0 = arith.constant 0 : i32
    return %arg0, %c0_i32 : i32, i32
  }
  func.func @transform_5(%arg0: i32) -> (i32, i32) {
    %c0_i32 = arith.constant 0 : i32
    %c0_i32_0 = arith.constant 0 : i32
    return %arg0, %c0_i32 : i32, i32
  }
}

module attributes {stable_mosaic.version = 11 : i64} {
  func.func @agg_kernel(%arg0: i32, %arg1: i32, %arg2: memref<256x512xbf16, #tpu.memory_space<vmem>>, %arg3: memref<512x128xbf16, #tpu.memory_space<vmem>>, %arg4: memref<256x128xf32, #tpu.memory_space<vmem>>, %arg5: memref<256x128xf32, #tpu.memory_space<vmem>>) attributes {dimension_semantics = [#tpu.dimension_semantics<parallel>, #tpu.dimension_semantics<arbitrary>], iteration_bounds = array<i64: 4, 2>, scalar_prefetch = 0 : i64, scratch_operands = 0 : i64, tpu.core_type = #tpu.core_type<tc>, window_params = [{transform_indices = @transform_0, window_bounds = array<i64: 256, 512>}, {transform_indices = @transform_1, window_bounds = array<i64: 512, 128>}, {transform_indices = @transform_2, window_bounds = array<i64: 256, 128>}, {transform_indices = @transform_3, window_bounds = array<i64: 256, 128>}]} {
    %c0_i32 = arith.constant 0 : i32
    %0 = arith.cmpi eq, %arg1, %c0_i32 : i32
    %1 = arith.extui %0 : i1 to i32
    %c0_i32_0 = arith.constant 0 : i32
    %2 = arith.cmpi ne, %1, %c0_i32_0 : i32
    scf.if %2 {
      %c0_8 = arith.constant 0 : index
      %c0_9 = arith.constant 0 : index
      %9 = vector.load %arg4[%c0_8, %c0_9] : memref<256x128xf32, #tpu.memory_space<vmem>>, vector<256x128xf32>
      %c0_10 = arith.constant 0 : index
      %c0_11 = arith.constant 0 : index
      %10 = vector.load %arg5[%c0_10, %c0_11] : memref<256x128xf32, #tpu.memory_space<vmem>>, vector<256x128xf32>
      tpu.vector_store %arg5[%c0_10, %c0_11], %9 {strides = array<i32>} : memref<256x128xf32, #tpu.memory_space<vmem>>, vector<256x128xf32>,
    } else {
    }
    %c0 = arith.constant 0 : index
    %c0_1 = arith.constant 0 : index
    %3 = vector.load %arg5[%c0, %c0_1] : memref<256x128xf32, #tpu.memory_space<vmem>>, vector<256x128xf32>
    %c0_2 = arith.constant 0 : index
    %c0_3 = arith.constant 0 : index
    %4 = vector.load %arg2[%c0_2, %c0_3] : memref<256x512xbf16, #tpu.memory_space<vmem>>, vector<256x512xbf16>
    %c0_4 = arith.constant 0 : index
    %c0_5 = arith.constant 0 : index
    %5 = vector.load %arg3[%c0_4, %c0_5] : memref<512x128xbf16, #tpu.memory_space<vmem>>, vector<512x128xbf16>
    %cst = arith.constant dense<0.000000e+00> : vector<256x128xf32>
    %6 = tpu.matmul %4, %5, %cst {dimension_numbers = #tpu.dot_dimension_numbers<[1], [0], [0], [1], [0, 0, 1, 1], [], []>} : vector<256x512xbf16>, vector<512x128xbf16>, vector<256x128xf32> -> vector<256x128xf32>
    %7 = arith.addf %3, %6 : vector<256x128xf32>
    %c0_6 = arith.constant 0 : index
    %c0_7 = arith.constant 0 : index
    %8 = vector.load %arg5[%c0_6, %c0_7] : memref<256x128xf32, #tpu.memory_space<vmem>>, vector<256x128xf32>
    tpu.vector_store %arg5[%c0_6, %c0_7], %7 {strides = array<i32>} : memref<256x128xf32, #tpu.memory_space<vmem>>, vector<256x128xf32>,
    return
  }
  func.func @transform_0(%arg0: i32, %arg1: i32) -> (i32, i32) {
    %c0_i32 = arith.constant 0 : i32
    return %arg0, %arg1 : i32, i32
  }
  func.func @transform_1(%arg0: i32, %arg1: i32) -> (i32, i32) {
    %c0_i32 = arith.constant 0 : i32
    %c0_i32_0 = arith.constant 0 : i32
    return %arg1, %c0_i32 : i32, i32
  }
  func.func @transform_2(%arg0: i32, %arg1: i32) -> (i32, i32) {
    %c0_i32 = arith.constant 0 : i32
    %c0_i32_0 = arith.constant 0 : i32
    return %arg0, %c0_i32 : i32, i32
  }
  func.func @transform_3(%arg0: i32, %arg1: i32) -> (i32, i32) {
    %c0_i32 = arith.constant 0 : i32
    %c0_i32_0 = arith.constant 0 : i32
    return %arg0, %c0_i32 : i32, i32
  }
}

</mosaic_0001>

<llo_original>
// kernel: sage_layer_pallas.2
$region0: #{sage_layer_pallas.2}
  #allocation0 [shape = 'u32[]', space=smem, size = 0x4, offset = 0x4, fixed_abs, tag = 'smem constant byte address 0x4 - core index']
  #allocation1 [shape = 'u32[72,128]{1,0:T(1,128)}', space=vmem, size = 0x9000, scoped, tag = 'internal scratch']
  %s0 = inlined_call_operand.vmem [shape: bf16[1024,128], index: 0, kind: input, shape index: {}]
  %s1 = inlined_call_operand.vmem [shape: bf16[128,128], index: 1, kind: input, shape index: {}]
  %s2 = inlined_call_operand.vmem [shape: bf16[128,128], index: 2, kind: input, shape index: {}]
  %s3 = inlined_call_operand.vmem [shape: f32[1,128], index: 3, kind: input, shape index: {}]
  %s4 = inlined_call_operand.vmem [shape: bf16[1024,128], index: 4, kind: output, shape index: {0}]
  %s5 = inlined_call_operand.vmem [shape: f32[1024,128], index: 5, kind: output, shape index: {1}]
  %6 = xla_tuple %s4, %s5
  %s7 = sld [smem:[#allocation0]]
  $region57: #{sage_layer_pallas.2} parent=0
    _
  %s9 = ssub.s32 1, %s7
  %s10 = scalar_select 0, %s9, %s7
  loop: start=0, step=1, limit=6
  $region2: #{sage_layer_pallas.2} parent=0 // loop_pre_header
    _
  $region3: #{sage_layer_pallas.2} parent=0 // loop_header
    %s12 = sphi 0, %s16
    %p13 = scmp.ge.s32.totalorder %s12, 6
    %s22 = sphi 0, %s24
    %s25 = sphi 0, %s22
    %s26 = sphi 0, %s25
    %s42 = sphi 0, %s26
    %s46 = sphi 0, %s46
    %s48 = sphi 0, %s46
    %s49 = sphi 0, %s48
    %s63 = sphi 0, %s49
    %s67 = sphi 0, %s67
    %s69 = sphi 0, %s67
    %s70 = sphi 0, %s69
    %s84 = sphi 0, %s70
    %s88 = sphi 0, %s88
    %s90 = sphi 0, %s88
    %s91 = sphi 0, %s90
    %s105 = sphi 0, %s91
    %s111 = sphi 0, %s113
    %s114 = sphi 0, %s111
    %s115 = sphi 0, %s114
    %s131 = sphi 0, %s115
    %s137 = sphi 0, %s139
    %s140 = sphi 0, %s137
    %s141 = sphi 0, %s140
    %s157 = sphi 0, %s141
  $region4: #{sage_layer_pallas.2} parent=0 // loop_header_branch
    %15 = sbr.rel (%p13) target = $region8
  $region5: #{sage_layer_pallas.2} parent=0 // loop_body
    %s17 = ssub.s32 %s12, 1
    %s18 = ssub.s32 %s12, 2
    %s19 = sadd.s32 %s12, 1
    %s20 = ssub.s32 %s12, %s19
    %p21 = scmp.eq.s32.totalorder %s20, 0
    %s23 = sadd.s32 %s22, 1
    %s24 = scalar_select %p21, %s22, %s23
    %p27 = pneg %p21
    %p28 = scmp.eq.s32.totalorder %s12, 3
    %p29 = por %p27, %p28
    %p30 = scmp.ne.s32.totalorder %s22, %s25
    %p31 = scmp.eq.s32.totalorder %s12, 0
    %p32 = por %p30, %p31
    %p33 = scmp.ne.s32.totalorder %s22, %s25
    %p34 = scmp.eq.s32.totalorder %s17, 3
    %p35 = por %p33, %p34
    %p36 = scmp.ne.s32.totalorder %s25, %s26
    %p37 = scmp.eq.s32.totalorder %s17, 0
    %p38 = por %p36, %p37
    %p39 = scmp.ne.s32.totalorder %s25, %s26
    %p40 = scmp.eq.s32.totalorder %s18, 3
    %p41 = por %p39, %p40
    %p43 = scmp.ne.s32.totalorder %s26, %s42
    %p44 = scmp.eq.s32.totalorder %s18, 0
    %p45 = por %p43, %p44
    %s47 = sadd.s32 %s46, 1
    %p50 = scmp.eq.s32.totalorder %s12, 3
    %p51 = scmp.ne.s32.totalorder %s46, %s48
    %p52 = scmp.eq.s32.totalorder %s12, 0
    %p53 = por %p51, %p52
    %p54 = scmp.ne.s32.totalorder %s46, %s48
    %p55 = scmp.eq.s32.totalorder %s17, 3
    %p56 = por %p54, %p55
    %p57 = scmp.ne.s32.totalorder %s48, %s49
    %p58 = scmp.eq.s32.totalorder %s17, 0
    %p59 = por %p57, %p58
    %p60 = scmp.ne.s32.totalorder %s48, %s49
    %p61 = scmp.eq.s32.totalorder %s18, 3
    %p62 = por %p60, %p61
    %p64 = scmp.ne.s32.totalorder %s49, %s63
    %p65 = scmp.eq.s32.totalorder %s18, 0
    %p66 = por %p64, %p65
    %s68 = sadd.s32 %s67, 1
    %p71 = scmp.eq.s32.totalorder %s12, 3
    %p72 = scmp.ne.s32.totalorder %s67, %s69
    %p73 = scmp.eq.s32.totalorder %s12, 0
    %p74 = por %p72, %p73
    %p75 = scmp.ne.s32.totalorder %s67, %s69
    %p76 = scmp.eq.s32.totalorder %s17, 3
    %p77 = por %p75, %p76
    %p78 = scmp.ne.s32.totalorder %s69, %s70
    %p79 = scmp.eq.s32.totalorder %s17, 0
    %p80 = por %p78, %p79
    %p81 = scmp.ne.s32.totalorder %s69, %s70
    %p82 = scmp.eq.s32.totalorder %s18, 3
    %p83 = por %p81, %p82
    %p85 = scmp.ne.s32.totalorder %s70, %s84
    %p86 = scmp.eq.s32.totalorder %s18, 0
    %p87 = por %p85, %p86
    %s89 = sadd.s32 %s88, 1
    %p92 = scmp.eq.s32.totalorder %s12, 3
    %p93 = scmp.ne.s32.totalorder %s88, %s90
    %p94 = scmp.eq.s32.totalorder %s12, 0
    %p95 = por %p93, %p94
    %p96 = scmp.ne.s32.totalorder %s88, %s90
    %p97 = scmp.eq.s32.totalorder %s17, 3
    %p98 = por %p96, %p97
    %p99 = scmp.ne.s32.totalorder %s90, %s91
    %p100 = scmp.eq.s32.totalorder %s17, 0
    %p101 = por %p99, %p100
    %p102 = scmp.ne.s32.totalorder %s90, %s91
    %p103 = scmp.eq.s32.totalorder %s18, 3
    %p104 = por %p102, %p103
    %p106 = scmp.ne.s32.totalorder %s91, %s105
    %p107 = scmp.eq.s32.totalorder %s18, 0
    %p108 = por %p106, %p107
    %s109 = ssub.s32 %s12, %s19
    %p110 = scmp.eq.s32.totalorder %s109, 0
    %s112 = sadd.s32 %s111, 1
    %s113 = scalar_select %p110, %s111, %s112
    %p116 = pneg %p110
    %p117 = scmp.eq.s32.totalorder %s12, 3
    %p118 = por %p116, %p117
    %p119 = scmp.ne.s32.totalorder %s111, %s114
    %p120 = scmp.eq.s32.totalorder %s12, 0
    %p121 = por %p119, %p120
    %p122 = scmp.ne.s32.totalorder %s111, %s114
    %p123 = scmp.eq.s32.totalorder %s17, 3
    %p124 = por %p122, %p123
    %p125 = scmp.ne.s32.totalorder %s114, %s115
    %p126 = scmp.eq.s32.totalorder %s17, 0
    %p127 = por %p125, %p126
    %p128 = scmp.ne.s32.totalorder %s114, %s115
    %p129 = scmp.eq.s32.totalorder %s18, 3
    %p130 = por %p128, %p129
    %p132 = scmp.ne.s32.totalorder %s115, %s131
    %p133 = scmp.eq.s32.totalorder %s18, 0
    %p134 = por %p132, %p133
    %s135 = ssub.s32 %s12, %s19
    %p136 = scmp.eq.s32.totalorder %s135, 0
    %s138 = sadd.s32 %s137, 1
    %s139 = scalar_select %p136, %s137, %s138
    %p142 = pneg %p136
    %p143 = scmp.eq.s32.totalorder %s12, 3
    %p144 = por %p142, %p143
    %p145 = scmp.ne.s32.totalorder %s137, %s140
    %p146 = scmp.eq.s32.totalorder %s12, 0
    %p147 = por %p145, %p146
    %p148 = scmp.ne.s32.totalorder %s137, %s140
    %p149 = scmp.eq.s32.totalorder %s17, 3
    %p150 = por %p148, %p149
    %p151 = scmp.ne.s32.totalorder %s140, %s141
    %p152 = scmp.eq.s32.totalorder %s17, 0
    %p153 = por %p151, %p152
    %p154 = scmp.ne.s32.totalorder %s140, %s141
    %p155 = scmp.eq.s32.totalorder %s18, 3
    %p156 = por %p154, %p155
    %p158 = scmp.ne.s32.totalorder %s141, %s157
    %p159 = scmp.eq.s32.totalorder %s18, 0
    %p160 = por %p158, %p159
    %p161 = scmp.le.s32.totalorder 1, %s12
    %p162 = scmp.lt.s32.totalorder %s12, 5
    %p163 = pnand %p161, %p162
    %p164 = pneg %p163
    // Predicated region
    $region9: #{sage_layer_pallas.2} parent=5 // pred_check
      _
    $region10: #{sage_layer_pallas.2} parent=5 // pred_check_branch
      %166 = sbr.rel (%p163) target = $region12
    $region11: #{sage_layer_pallas.2} parent=5 // pred_region
      %s167 = ssub.s32 %s12, 1
      // Predicated region
      $region13: #{sage_layer_pallas.2} parent=11 // pred_check
        %p168 = pneg %p59
      $region14: #{sage_layer_pallas.2} parent=11 // pred_check_branch
        %170 = sbr.rel (%p168) target = $region16
      $region15: #{sage_layer_pallas.2} parent=11 // pred_region
        _
      $region16: #{sage_layer_pallas.2} parent=11 // pred_fallthru
        _
      // Predicated region
      $region17: #{sage_layer_pallas.2} parent=11 // pred_check
        %p171 = pneg %p80
      $region18: #{sage_layer_pallas.2} parent=11 // pred_check_branch
        %173 = sbr.rel (%p171) target = $region20
      $region19: #{sage_layer_pallas.2} parent=11 // pred_region
        _
      $region20: #{sage_layer_pallas.2} parent=11 // pred_fallthru
        _
      // Predicated region
      $region21: #{sage_layer_pallas.2} parent=11 // pred_check
        %p174 = pneg %p101
      $region22: #{sage_layer_pallas.2} parent=11 // pred_check_branch
        %176 = sbr.rel (%p174) target = $region24
      $region23: #{sage_layer_pallas.2} parent=11 // pred_region
        _
      $region24: #{sage_layer_pallas.2} parent=11 // pred_fallthru
        _
    $region12: #{sage_layer_pallas.2} parent=5 // pred_fallthru
      _
    %p177 = scmp.lt.s32.totalorder %s12, 4
    // Predicated region
    $region25: #{sage_layer_pallas.2} parent=5 // pred_check
      %p178 = pneg %p177
    $region26: #{sage_layer_pallas.2} parent=5 // pred_check_branch
      %180 = sbr.rel (%p178) target = $region28
    $region27: #{sage_layer_pallas.2} parent=5 // pred_region
      // Predicated region
      $region29: #{sage_layer_pallas.2} parent=27 // pred_check
        %p181 = pneg %p32
      $region30: #{sage_layer_pallas.2} parent=27 // pred_check_branch
        %183 = sbr.rel (%p181) target = $region32
      $region31: #{sage_layer_pallas.2} parent=27 // pred_region
        %s184 = smul.u32 32, %s12
        %p185 = scmp.lt.s32.totalorder %s184, 127
        %s186 = scalar_select %p185, %s184, 127
        %s187 = smul.addr %s186, 4
        %s188 = scalar_lea.vmem %s0, %s187
        %s189 = smul.u32 32, %s12
      $region32: #{sage_layer_pallas.2} parent=27 // pred_fallthru
        _
    $region28: #{sage_layer_pallas.2} parent=5 // pred_fallthru
      _
    %p190 = scmp.le.s32.totalorder 1, %s12
    %p191 = scmp.lt.s32.totalorder %s12, 5
    %p192 = pnand %p190, %p191
    %p193 = pneg %p192
    // Predicated region
    $region33: #{sage_layer_pallas.2} parent=5 // pred_check
      _
    $region34: #{sage_layer_pallas.2} parent=5 // pred_check_branch
      %195 = sbr.rel (%p192) target = $region36
    $region35: #{sage_layer_pallas.2} parent=5 // pred_region
      %s196 = ssub.s32 %s12, 1
      %s197 = smul.u32 32, %s17
      %p198 = scmp.lt.s32.totalorder %s197, 127
      %s199 = scalar_select %p198, %s197, 127
      %s200 = smul.addr %s199, 4
      %s201 = scalar_lea.vmem %s0, %s200
      %p202 = pneg %p38
      %p203 = pneg %p35
      %p204 = pneg %p59
      %p205 = pneg %p56
      %p206 = pneg %p80
      %p207 = pneg %p77
      %p208 = pneg %p101
      %p209 = pneg %p98
      %p210 = pneg %p127
      %p211 = pneg %p124
      %s212 = smul.u32 32, %s17
      %p213 = scmp.lt.s32.totalorder %s212, 127
      %s214 = scalar_select %p213, %s212, 127
      %s215 = smul.addr %s214, 4
      %s216 = scalar_lea.vmem %s4, %s215
      %p217 = pneg %p153
      %p218 = pneg %p150
      %s219 = smul.u32 32, %s17
      %p220 = scmp.lt.s32.totalorder %s219, 127
      %s221 = scalar_select %p220, %s219, 127
      %s222 = smul.addr %s221, 8
      %s223 = scalar_lea.vmem %s5, %s222
      %s224 = smul.u32 32, %s17
      %p225 = scmp.lt.s32.totalorder %s224, 127
      %s226 = scalar_select %p225, %s224, 127
      %s227 = smul.addr %s226, 4
      %s228 = scalar_lea.vmem %s0, %s227
      %s229 = smul.u32 32, %s17
      %s230 = smul.u32 32, %s17
      %p231 = scmp.lt.s32.totalorder %s230, 127
      %s232 = scalar_select %p231, %s230, 127
      %s233 = smul.addr %s232, 4
      %s234 = scalar_lea.vmem %s4, %s233
      %s235 = smul.u32 32, %s17
      %s236 = smul.u32 32, %s17
      %p237 = scmp.lt.s32.totalorder %s236, 127
      %s238 = scalar_select %p237, %s236, 127
      %s239 = smul.addr %s238, 8
      %s240 = scalar_lea.vmem %s5, %s239
      %s241 = smul.u32 32, %s17
      %v242 = vld [vmem:[%s228] sm:$0xf]
      %v243 = vld [vmem:[%s228 + $0x4] sm:$0xf]
      %v244 = vld [vmem:[%s228 + $0x8] sm:$0xf]
      %v245 = vld [vmem:[%s228 + $0xc] sm:$0xf]
      %v246 = vld [vmem:[%s228 + $0x10] sm:$0xf]
      %v247 = vld [vmem:[%s228 + $0x14] sm:$0xf]
      %v248 = vld [vmem:[%s228 + $0x18] sm:$0xf]
      %v249 = vld [vmem:[%s228 + $0x1c] sm:$0xf]
      %v250 = vld [vmem:[%s228 + $0x20] sm:$0xf]
      %v251 = vld [vmem:[%s228 + $0x24] sm:$0xf]
      %v252 = vld [vmem:[%s228 + $0x28] sm:$0xf]
      %v253 = vld [vmem:[%s228 + $0x2c] sm:$0xf]
      %v254 = vld [vmem:[%s228 + $0x30] sm:$0xf]
      %v255 = vld [vmem:[%s228 + $0x34] sm:$0xf]
      %v256 = vld [vmem:[%s228 + $0x38] sm:$0xf]
      %v257 = vld [vmem:[%s228 + $0x3c] sm:$0xf]
      %v258 = vld [vmem:[%s228 + $0x40] sm:$0xf]
      %v259 = vld [vmem:[%s228 + $0x44] sm:$0xf]
      %v260 = vld [vmem:[%s228 + $0x48] sm:$0xf]
      %v261 = vld [vmem:[%s228 + $0x4c] sm:$0xf]
      %v262 = vld [vmem:[%s228 + $0x50] sm:$0xf]
      %v263 = vld [vmem:[%s228 + $0x54] sm:$0xf]
      %v264 = vld [vmem:[%s228 + $0x58] sm:$0xf]
      %v265 = vld [vmem:[%s228 + $0x5c] sm:$0xf]
      %v266 = vld [vmem:[%s228 + $0x60] sm:$0xf]
      %v267 = vld [vmem:[%s228 + $0x64] sm:$0xf]
      %v268 = vld [vmem:[%s228 + $0x68] sm:$0xf]
      %v269 = vld [vmem:[%s228 + $0x6c] sm:$0xf]
      %v270 = vld [vmem:[%s228 + $0x70] sm:$0xf]
      %v271 = vld [vmem:[%s228 + $0x74] sm:$0xf]
      %v272 = vld [vmem:[%s228 + $0x78] sm:$0xf]
      %v273 = vld [vmem:[%s228 + $0x7c] sm:$0xf]
      %v274 = vld [vmem:[%s1] sm:$0xf]
      %v275 = vld [vmem:[%s1 + $0x4] sm:$0xf]
      %v276 = vld [vmem:[%s1 + $0x8] sm:$0xf]
      %v277 = vld [vmem:[%s1 + $0xc] sm:$0xf]
      %v278 = vld [vmem:[%s1 + $0x10] sm:$0xf]
      %v279 = vld [vmem:[%s1 + $0x14] sm:$0xf]
      %v280 = vld [vmem:[%s1 + $0x18] sm:$0xf]
      %v281 = vld [vmem:[%s1 + $0x1c] sm:$0xf]
      %v282 = vld [vmem:[%s1 + $0x20] sm:$0xf]
      %v283 = vld [vmem:[%s1 + $0x24] sm:$0xf]
      %v284 = vld [vmem:[%s1 + $0x28] sm:$0xf]
      %v285 = vld [vmem:[%s1 + $0x2c] sm:$0xf]
      %v286 = vld [vmem:[%s1 + $0x30] sm:$0xf]
      %v287 = vld [vmem:[%s1 + $0x34] sm:$0xf]
      %v288 = vld [vmem:[%s1 + $0x38] sm:$0xf]
      %v289 = vld [vmem:[%s1 + $0x3c] sm:$0xf]
      %v322 = vunpack.c.l.b16 %v242
      %v323 = vunpack.c.l.b16 %v243
      %v324 = vunpack.c.l.b16 %v244
      %v325 = vunpack.c.l.b16 %v245
      %v326 = vunpack.c.l.b16 %v246
      %v327 = vunpack.c.l.b16 %v247
      %v328 = vunpack.c.l.b16 %v248
      %v329 = vunpack.c.l.b16 %v249
      %v330 = vunpack.c.l.b16 %v250
      %v331 = vunpack.c.l.b16 %v251
      %v332 = vunpack.c.l.b16 %v252
      %v333 = vunpack.c.l.b16 %v253
      %v334 = vunpack.c.l.b16 %v254
      %v335 = vunpack.c.l.b16 %v255
      %v336 = vunpack.c.l.b16 %v256
      %v337 = vunpack.c.l.b16 %v257
      %v338 = vunpack.c.l.b16 %v258
      %v339 = vunpack.c.l.b16 %v259
      %v340 = vunpack.c.l.b16 %v260
      %v341 = vunpack.c.l.b16 %v261
      %v342 = vunpack.c.l.b16 %v262
      %v343 = vunpack.c.l.b16 %v263
      %v344 = vunpack.c.l.b16 %v264
      %v345 = vunpack.c.l.b16 %v265
      %v346 = vunpack.c.l.b16 %v266
      %v347 = vunpack.c.l.b16 %v267
      %v348 = vunpack.c.l.b16 %v268
      %v349 = vunpack.c.l.b16 %v269
      %v350 = vunpack.c.l.b16 %v270
      %v351 = vunpack.c.l.b16 %v271
      %v352 = vunpack.c.l.b16 %v272
      %v353 = vunpack.c.l.b16 %v273
      %v354 = vpack.c.b16 %v323, %v322
      %v355 = vpack.c.b16 %v325, %v324
      %v356 = vpack.c.b16 %v327, %v326
      %v357 = vpack.c.b16 %v329, %v328
      %v358 = vpack.c.b16 %v331, %v330
      %v359 = vpack.c.b16 %v333, %v332
      %v360 = vpack.c.b16 %v335, %v334
      %v361 = vpack.c.b16 %v337, %v336
      %v362 = vpack.c.b16 %v339, %v338
      %v363 = vpack.c.b16 %v341, %v340
      %v364 = vpack.c.b16 %v343, %v342
      %v365 = vpack.c.b16 %v345, %v344
      %v366 = vpack.c.b16 %v347, %v346
      %v367 = vpack.c.b16 %v349, %v348
      %v368 = vpack.c.b16 %v351, %v350
      %v369 = vpack.c.b16 %v353, %v352
      %v402 = vunpack.c.l.b16 %v274
      %v403 = vunpack.c.l.b16 %v275
      %v404 = vunpack.c.l.b16 %v276
      %v405 = vunpack.c.l.b16 %v277
      %v406 = vunpack.c.l.b16 %v278
      %v407 = vunpack.c.l.b16 %v279
      %v408 = vunpack.c.l.b16 %v280
      %v409 = vunpack.c.l.b16 %v281
      %v410 = vunpack.c.l.b16 %v282
      %v411 = vunpack.c.l.b16 %v283
      %v412 = vunpack.c.l.b16 %v284
      %v413 = vunpack.c.l.b16 %v285
      %v414 = vunpack.c.l.b16 %v286
      %v415 = vunpack.c.l.b16 %v287
      %v416 = vunpack.c.l.b16 %v288
      %v417 = vunpack.c.l.b16 %v289
      %v418 = vpack.c.b16 %v403, %v402
      %v419 = vpack.c.b16 %v405, %v404
      %v420 = vpack.c.b16 %v407, %v406
      %v421 = vpack.c.b16 %v409, %v408
      %v422 = vpack.c.b16 %v411, %v410
      %v423 = vpack.c.b16 %v413, %v412
      %v424 = vpack.c.b16 %v415, %v414
      %v425 = vpack.c.b16 %v417, %v416
      %434 = vmatpush.bf16.msra.mxu0 %v425
      %435 = vmatpush.bf16.msra.mxu0 %v424
      %436 = vmatpush.bf16.msra.mxu0 %v423
      %437 = vmatpush.bf16.msra.mxu0 %v422
      %438 = vmatpush.bf16.msra.mxu0 %v421
      %439 = vmatpush.bf16.msra.mxu0 %v420
      %440 = vmatpush.bf16.msra.mxu0 %v419
      %441 = vmatpush.bf16.msra.mxu0 %v418
      %442 = vmatmul.bf16.gmra.mxu0 %v354
      %v443 = vpop.f32.mrf.mxu0
      %v444 = vadd.f32 0.0, %v443
      %v445 = vpop.f32.mrf.mxu0
      %v446 = vadd.f32 0.0, %v445
      %447 = vmatmul.bf16.gmra.mxu0 %v355
      %v448 = vpop.f32.mrf.mxu0
      %v449 = vadd.f32 0.0, %v448
      %v450 = vpop.f32.mrf.mxu0
      %v451 = vadd.f32 0.0, %v450
      %452 = vmatmul.bf16.gmra.mxu0 %v356
      %v453 = vpop.f32.mrf.mxu0
      %v454 = vadd.f32 0.0, %v453
      %v455 = vpop.f32.mrf.mxu0
      %v456 = vadd.f32 0.0, %v455
      %457 = vmatmul.bf16.gmra.mxu0 %v357
      %v458 = vpop.f32.mrf.mxu0
      %v459 = vadd.f32 0.0, %v458
      %v460 = vpop.f32.mrf.mxu0
      %v461 = vadd.f32 0.0, %v460
      %462 = vmatmul.bf16.gmra.mxu0 %v358
      %v463 = vpop.f32.mrf.mxu0
      %v464 = vadd.f32 0.0, %v463
      %v465 = vpop.f32.mrf.mxu0
      %v466 = vadd.f32 0.0, %v465
      %467 = vmatmul.bf16.gmra.mxu0 %v359
      %v468 = vpop.f32.mrf.mxu0
      %v469 = vadd.f32 0.0, %v468
      %v470 = vpop.f32.mrf.mxu0
      %v471 = vadd.f32 0.0, %v470
      %472 = vmatmul.bf16.gmra.mxu0 %v360
      %v473 = vpop.f32.mrf.mxu0
      %v474 = vadd.f32 0.0, %v473
      %v475 = vpop.f32.mrf.mxu0
      %v476 = vadd.f32 0.0, %v475
      %477 = vmatmul.bf16.gmra.mxu0 %v361
      %v478 = vpop.f32.mrf.mxu0
      %v479 = vadd.f32 0.0, %v478
      %v480 = vpop.f32.mrf.mxu0
      %v481 = vadd.f32 0.0, %v480
      %482 = vmatmul.bf16.gmra.mxu0 %v362
      %v483 = vpop.f32.mrf.mxu0
      %v484 = vadd.f32 0.0, %v483
      %v485 = vpop.f32.mrf.mxu0
      %v486 = vadd.f32 0.0, %v485
      %487 = vmatmul.bf16.gmra.mxu0 %v363
      %v488 = vpop.f32.mrf.mxu0
      %v489 = vadd.f32 0.0, %v488
      %v490 = vpop.f32.mrf.mxu0
      %v491 = vadd.f32 0.0, %v490
      %492 = vmatmul.bf16.gmra.mxu0 %v364
      %v493 = vpop.f32.mrf.mxu0
      %v494 = vadd.f32 0.0, %v493
      %v495 = vpop.f32.mrf.mxu0
      %v496 = vadd.f32 0.0, %v495
      %497 = vmatmul.bf16.gmra.mxu0 %v365
      %v498 = vpop.f32.mrf.mxu0
      %v499 = vadd.f32 0.0, %v498
      %v500 = vpop.f32.mrf.mxu0
      %v501 = vadd.f32 0.0, %v500
      %502 = vmatmul.bf16.gmra.mxu0 %v366
      %v503 = vpop.f32.mrf.mxu0
      %v504 = vadd.f32 0.0, %v503
      %v505 = vpop.f32.mrf.mxu0
      %v506 = vadd.f32 0.0, %v505
      %507 = vmatmul.bf16.gmra.mxu0 %v367
      %v508 = vpop.f32.mrf.mxu0
      %v509 = vadd.f32 0.0, %v508
      %v510 = vpop.f32.mrf.mxu0
      %v511 = vadd.f32 0.0, %v510
      %512 = vmatmul.bf16.gmra.mxu0 %v368
      %v513 = vpop.f32.mrf.mxu0
      %v514 = vadd.f32 0.0, %v513
      %v515 = vpop.f32.mrf.mxu0
      %v516 = vadd.f32 0.0, %v515
      %517 = vmatmul.bf16.gmra.mxu0 %v369
      %v518 = vpop.f32.mrf.mxu0
      %v519 = vadd.f32 0.0, %v518
      %v520 = vpop.f32.mrf.mxu0
      %v521 = vadd.f32 0.0, %v520
      %522 = vdwg.mxu0
      %v523 = vpack.c.bf16 %v444, %v444
      %v524 = vpack.c.bf16 %v446, %v446
      %v525 = vpack.c.bf16 %v449, %v449
      %v526 = vpack.c.bf16 %v451, %v451
      %v527 = vpack.c.bf16 %v454, %v454
      %v528 = vpack.c.bf16 %v456, %v456
      %v529 = vpack.c.bf16 %v459, %v459
      %v530 = vpack.c.bf16 %v461, %v461
      %v531 = vpack.c.bf16 %v464, %v464
      %v532 = vpack.c.bf16 %v466, %v466
      %v533 = vpack.c.bf16 %v469, %v469
      %v534 = vpack.c.bf16 %v471, %v471
      %v535 = vpack.c.bf16 %v474, %v474
      %v536 = vpack.c.bf16 %v476, %v476
      %v537 = vpack.c.bf16 %v479, %v479
      %v538 = vpack.c.bf16 %v481, %v481
      %v539 = vpack.c.bf16 %v484, %v484
      %v540 = vpack.c.bf16 %v486, %v486
      %v541 = vpack.c.bf16 %v489, %v489
      %v542 = vpack.c.bf16 %v491, %v491
      %v543 = vpack.c.bf16 %v494, %v494
      %v544 = vpack.c.bf16 %v496, %v496
      %v545 = vpack.c.bf16 %v499, %v499
      %v546 = vpack.c.bf16 %v501, %v501
      %v547 = vpack.c.bf16 %v504, %v504
      %v548 = vpack.c.bf16 %v506, %v506
      %v549 = vpack.c.bf16 %v509, %v509
      %v550 = vpack.c.bf16 %v511, %v511
      %v551 = vpack.c.bf16 %v514, %v514
      %v552 = vpack.c.bf16 %v516, %v516
      %v553 = vpack.c.bf16 %v519, %v519
      %v554 = vpack.c.bf16 %v521, %v521
      %555 = vst [vmem:[%s234] sm:$0xf] %v523
      %556 = vst [vmem:[%s234 + $0x4] sm:$0xf] %v524
      %557 = vst [vmem:[%s234 + $0x8] sm:$0xf] %v525
      %558 = vst [vmem:[%s234 + $0xc] sm:$0xf] %v526
      %559 = vst [vmem:[%s234 + $0x10] sm:$0xf] %v527
      %560 = vst [vmem:[%s234 + $0x14] sm:$0xf] %v528
      %561 = vst [vmem:[%s234 + $0x18] sm:$0xf] %v529
      %562 = vst [vmem:[%s234 + $0x1c] sm:$0xf] %v530
      %563 = vst [vmem:[%s234 + $0x20] sm:$0xf] %v531
      %564 = vst [vmem:[%s234 + $0x24] sm:$0xf] %v532
      %565 = vst [vmem:[%s234 + $0x28] sm:$0xf] %v533
      %566 = vst [vmem:[%s234 + $0x2c] sm:$0xf] %v534
      %567 = vst [vmem:[%s234 + $0x30] sm:$0xf] %v535
      %568 = vst [vmem:[%s234 + $0x34] sm:$0xf] %v536
      %569 = vst [vmem:[%s234 + $0x38] sm:$0xf] %v537
      %570 = vst [vmem:[%s234 + $0x3c] sm:$0xf] %v538
      %571 = vst [vmem:[%s234 + $0x40] sm:$0xf] %v539
      %572 = vst [vmem:[%s234 + $0x44] sm:$0xf] %v540
      %573 = vst [vmem:[%s234 + $0x48] sm:$0xf] %v541
      %574 = vst [vmem:[%s234 + $0x4c] sm:$0xf] %v542
      %575 = vst [vmem:[%s234 + $0x50] sm:$0xf] %v543
      %576 = vst [vmem:[%s234 + $0x54] sm:$0xf] %v544
      %577 = vst [vmem:[%s234 + $0x58] sm:$0xf] %v545
      %578 = vst [vmem:[%s234 + $0x5c] sm:$0xf] %v546
      %579 = vst [vmem:[%s234 + $0x60] sm:$0xf] %v547
      %580 = vst [vmem:[%s234 + $0x64] sm:$0xf] %v548
      %581 = vst [vmem:[%s234 + $0x68] sm:$0xf] %v549
      %582 = vst [vmem:[%s234 + $0x6c] sm:$0xf] %v550
      %583 = vst [vmem:[%s234 + $0x70] sm:$0xf] %v551
      %584 = vst [vmem:[%s234 + $0x74] sm:$0xf] %v552
      %585 = vst [vmem:[%s234 + $0x78] sm:$0xf] %v553
      %586 = vst [vmem:[%s234 + $0x7c] sm:$0xf] %v554
      %v587 = vld [vmem:[%s2] sm:$0xf]
      %v588 = vld [vmem:[%s2 + $0x4] sm:$0xf]
      %v589 = vld [vmem:[%s2 + $0x8] sm:$0xf]
      %v590 = vld [vmem:[%s2 + $0xc] sm:$0xf]
      %v591 = vld [vmem:[%s2 + $0x10] sm:$0xf]
      %v592 = vld [vmem:[%s2 + $0x14] sm:$0xf]
      %v593 = vld [vmem:[%s2 + $0x18] sm:$0xf]
      %v594 = vld [vmem:[%s2 + $0x1c] sm:$0xf]
      %v595 = vld [vmem:[%s2 + $0x20] sm:$0xf]
      %v596 = vld [vmem:[%s2 + $0x24] sm:$0xf]
      %v597 = vld [vmem:[%s2 + $0x28] sm:$0xf]
      %v598 = vld [vmem:[%s2 + $0x2c] sm:$0xf]
      %v599 = vld [vmem:[%s2 + $0x30] sm:$0xf]
      %v600 = vld [vmem:[%s2 + $0x34] sm:$0xf]
      %v601 = vld [vmem:[%s2 + $0x38] sm:$0xf]
      %v602 = vld [vmem:[%s2 + $0x3c] sm:$0xf]
      %v603 = vld [vmem:[%s3] sm:$0x1]
      %v605 = vperm.slane %v603, 0
      %v623 = vunpack.c.l.b16 %v587
      %v624 = vunpack.c.l.b16 %v588
      %v625 = vunpack.c.l.b16 %v589
      %v626 = vunpack.c.l.b16 %v590
      %v627 = vunpack.c.l.b16 %v591
      %v628 = vunpack.c.l.b16 %v592
      %v629 = vunpack.c.l.b16 %v593
      %v630 = vunpack.c.l.b16 %v594
      %v631 = vunpack.c.l.b16 %v595
      %v632 = vunpack.c.l.b16 %v596
      %v633 = vunpack.c.l.b16 %v597
      %v634 = vunpack.c.l.b16 %v598
      %v635 = vunpack.c.l.b16 %v599
      %v636 = vunpack.c.l.b16 %v600
      %v637 = vunpack.c.l.b16 %v601
      %v638 = vunpack.c.l.b16 %v602
      %v639 = vpack.c.b16 %v624, %v623
      %v640 = vpack.c.b16 %v626, %v625
      %v641 = vpack.c.b16 %v628, %v627
      %v642 = vpack.c.b16 %v630, %v629
      %v643 = vpack.c.b16 %v632, %v631
      %v644 = vpack.c.b16 %v634, %v633
      %v645 = vpack.c.b16 %v636, %v635
      %v646 = vpack.c.b16 %v638, %v637
      %655 = vmatpush.bf16.msra.mxu0 %v646
      %656 = vmatpush.bf16.msra.mxu0 %v645
      %657 = vmatpush.bf16.msra.mxu0 %v644
      %658 = vmatpush.bf16.msra.mxu0 %v643
      %659 = vmatpush.bf16.msra.mxu0 %v642
      %660 = vmatpush.bf16.msra.mxu0 %v641
      %661 = vmatpush.bf16.msra.mxu0 %v640
      %662 = vmatpush.bf16.msra.mxu0 %v639
      %663 = vmatmul.bf16.gmra.mxu0 %v354
      %v664 = vpop.f32.mrf.mxu0
      %v665 = vadd.f32 %v605, %v664
      %v666 = vpop.f32.mrf.mxu0
      %v667 = vadd.f32 %v605, %v666
      %668 = vmatmul.bf16.gmra.mxu0 %v355
      %v669 = vpop.f32.mrf.mxu0
      %v670 = vadd.f32 %v605, %v669
      %v671 = vpop.f32.mrf.mxu0
      %v672 = vadd.f32 %v605, %v671
      %673 = vmatmul.bf16.gmra.mxu0 %v356
      %v674 = vpop.f32.mrf.mxu0
      %v675 = vadd.f32 %v605, %v674
      %v676 = vpop.f32.mrf.mxu0
      %v677 = vadd.f32 %v605, %v676
      %678 = vmatmul.bf16.gmra.mxu0 %v357
      %v679 = vpop.f32.mrf.mxu0
      %v680 = vadd.f32 %v605, %v679
      %v681 = vpop.f32.mrf.mxu0
      %v682 = vadd.f32 %v605, %v681
      %683 = vmatmul.bf16.gmra.mxu0 %v358
      %v684 = vpop.f32.mrf.mxu0
      %v685 = vadd.f32 %v605, %v684
      %v686 = vpop.f32.mrf.mxu0
      %v687 = vadd.f32 %v605, %v686
      %688 = vmatmul.bf16.gmra.mxu0 %v359
      %v689 = vpop.f32.mrf.mxu0
      %v690 = vadd.f32 %v605, %v689
      %v691 = vpop.f32.mrf.mxu0
      %v692 = vadd.f32 %v605, %v691
      %693 = vmatmul.bf16.gmra.mxu0 %v360
      %v694 = vpop.f32.mrf.mxu0
      %v695 = vadd.f32 %v605, %v694
      %v696 = vpop.f32.mrf.mxu0
      %v697 = vadd.f32 %v605, %v696
      %698 = vmatmul.bf16.gmra.mxu0 %v361
      %v699 = vpop.f32.mrf.mxu0
      %v700 = vadd.f32 %v605, %v699
      %v701 = vpop.f32.mrf.mxu0
      %v702 = vadd.f32 %v605, %v701
      %703 = vmatmul.bf16.gmra.mxu0 %v362
      %v704 = vpop.f32.mrf.mxu0
      %v705 = vadd.f32 %v605, %v704
      %v706 = vpop.f32.mrf.mxu0
      %v707 = vadd.f32 %v605, %v706
      %708 = vmatmul.bf16.gmra.mxu0 %v363
      %v709 = vpop.f32.mrf.mxu0
      %v710 = vadd.f32 %v605, %v709
      %v711 = vpop.f32.mrf.mxu0
      %v712 = vadd.f32 %v605, %v711
      %713 = vmatmul.bf16.gmra.mxu0 %v364
      %v714 = vpop.f32.mrf.mxu0
      %v715 = vadd.f32 %v605, %v714
      %v716 = vpop.f32.mrf.mxu0
      %v717 = vadd.f32 %v605, %v716
      %718 = vmatmul.bf16.gmra.mxu0 %v365
      %v719 = vpop.f32.mrf.mxu0
      %v720 = vadd.f32 %v605, %v719
      %v721 = vpop.f32.mrf.mxu0
      %v722 = vadd.f32 %v605, %v721
      %723 = vmatmul.bf16.gmra.mxu0 %v366
      %v724 = vpop.f32.mrf.mxu0
      %v725 = vadd.f32 %v605, %v724
      %v726 = vpop.f32.mrf.mxu0
      %v727 = vadd.f32 %v605, %v726
      %728 = vmatmul.bf16.gmra.mxu0 %v367
      %v729 = vpop.f32.mrf.mxu0
      %v730 = vadd.f32 %v605, %v729
      %v731 = vpop.f32.mrf.mxu0
      %v732 = vadd.f32 %v605, %v731
      %733 = vmatmul.bf16.gmra.mxu0 %v368
      %v734 = vpop.f32.mrf.mxu0
      %v735 = vadd.f32 %v605, %v734
      %v736 = vpop.f32.mrf.mxu0
      %v737 = vadd.f32 %v605, %v736
      %738 = vmatmul.bf16.gmra.mxu0 %v369
      %v739 = vpop.f32.mrf.mxu0
      %v740 = vadd.f32 %v605, %v739
      %v741 = vpop.f32.mrf.mxu0
      %v742 = vadd.f32 %v605, %v741
      %743 = vdwg.mxu0
      %744 = vst [vmem:[%s240] sm:$0xff] %v665
      %745 = vst [vmem:[%s240 + $0x8] sm:$0xff] %v667
      %746 = vst [vmem:[%s240 + $0x10] sm:$0xff] %v670
      %747 = vst [vmem:[%s240 + $0x18] sm:$0xff] %v672
      %748 = vst [vmem:[%s240 + $0x20] sm:$0xff] %v675
      %749 = vst [vmem:[%s240 + $0x28] sm:$0xff] %v677
      %750 = vst [vmem:[%s240 + $0x30] sm:$0xff] %v680
      %751 = vst [vmem:[%s240 + $0x38] sm:$0xff] %v682
      %752 = vst [vmem:[%s240 + $0x40] sm:$0xff] %v685
      %753 = vst [vmem:[%s240 + $0x48] sm:$0xff] %v687
      %754 = vst [vmem:[%s240 + $0x50] sm:$0xff] %v690
      %755 = vst [vmem:[%s240 + $0x58] sm:$0xff] %v692
      %756 = vst [vmem:[%s240 + $0x60] sm:$0xff] %v695
      %757 = vst [vmem:[%s240 + $0x68] sm:$0xff] %v697
      %758 = vst [vmem:[%s240 + $0x70] sm:$0xff] %v700
      %759 = vst [vmem:[%s240 + $0x78] sm:$0xff] %v702
      %760 = vst [vmem:[%s240 + $0x80] sm:$0xff] %v705
      %761 = vst [vmem:[%s240 + $0x88] sm:$0xff] %v707
      %762 = vst [vmem:[%s240 + $0x90] sm:$0xff] %v710
      %763 = vst [vmem:[%s240 + $0x98] sm:$0xff] %v712
      %764 = vst [vmem:[%s240 + $0xa0] sm:$0xff] %v715
      %765 = vst [vmem:[%s240 + $0xa8] sm:$0xff] %v717
      %766 = vst [vmem:[%s240 + $0xb0] sm:$0xff] %v720
      %767 = vst [vmem:[%s240 + $0xb8] sm:$0xff] %v722
      %768 = vst [vmem:[%s240 + $0xc0] sm:$0xff] %v725
      %769 = vst [vmem:[%s240 + $0xc8] sm:$0xff] %v727
      %770 = vst [vmem:[%s240 + $0xd0] sm:$0xff] %v730
      %771 = vst [vmem:[%s240 + $0xd8] sm:$0xff] %v732
      %772 = vst [vmem:[%s240 + $0xe0] sm:$0xff] %v735
      %773 = vst [vmem:[%s240 + $0xe8] sm:$0xff] %v737
      %774 = vst [vmem:[%s240 + $0xf0] sm:$0xff] %v740
      %775 = vst [vmem:[%s240 + $0xf8] sm:$0xff] %v742
      %s776 = smul.u32 32, %s17
      %p777 = scmp.lt.s32.totalorder %s776, 127
      %s778 = scalar_select %p777, %s776, 127
      %s779 = smul.addr %s778, 4
      %s780 = scalar_lea.vmem %s4, %s779
      %s781 = smul.u32 32, %s17
      %p782 = scmp.lt.s32.totalorder %s781, 127
      %s783 = scalar_select %p782, %s781, 127
      %s784 = smul.addr %s783, 8
      %s785 = scalar_lea.vmem %s5, %s784
      // Predicated region
      $region37: #{sage_layer_pallas.2} parent=35 // pred_check
        %p786 = pneg %p124
      $region38: #{sage_layer_pallas.2} parent=35 // pred_check_branch
        %788 = sbr.rel (%p786) target = $region40
      $region39: #{sage_layer_pallas.2} parent=35 // pred_region
        %s789 = smul.u32 32, %s17
      $region40: #{sage_layer_pallas.2} parent=35 // pred_fallthru
        _
      // Predicated region
      $region41: #{sage_layer_pallas.2} parent=35 // pred_check
        %p790 = pneg %p150
      $region42: #{sage_layer_pallas.2} parent=35 // pred_check_branch
        %792 = sbr.rel (%p790) target = $region44
      $region43: #{sage_layer_pallas.2} parent=35 // pred_region
        %s793 = smul.u32 32, %s17
      $region44: #{sage_layer_pallas.2} parent=35 // pred_fallthru
        _
    $region36: #{sage_layer_pallas.2} parent=5 // pred_fallthru
      _
    %p794 = scmp.le.s32.totalorder 2, %s12
    // Predicated region
    $region45: #{sage_layer_pallas.2} parent=5 // pred_check
      %p795 = pneg %p794
    $region46: #{sage_layer_pallas.2} parent=5 // pred_check_branch
      %797 = sbr.rel (%p795) target = $region48
    $region47: #{sage_layer_pallas.2} parent=5 // pred_region
      %s798 = ssub.s32 %s12, 2
      // Predicated region
      $region49: #{sage_layer_pallas.2} parent=47 // pred_check
        %p799 = pneg %p130
      $region50: #{sage_layer_pallas.2} parent=47 // pred_check_branch
        %801 = sbr.rel (%p799) target = $region52
      $region51: #{sage_layer_pallas.2} parent=47 // pred_region
        %s802 = smul.u32 32, %s18
        %p803 = scmp.lt.s32.totalorder %s802, 127
        %s804 = scalar_select %p803, %s802, 127
        %s805 = smul.addr %s804, 4
        %s806 = scalar_lea.vmem %s4, %s805
      $region52: #{sage_layer_pallas.2} parent=47 // pred_fallthru
        _
      // Predicated region
      $region53: #{sage_layer_pallas.2} parent=47 // pred_check
        %p807 = pneg %p156
      $region54: #{sage_layer_pallas.2} parent=47 // pred_check_branch
        %809 = sbr.rel (%p807) target = $region56
      $region55: #{sage_layer_pallas.2} parent=47 // pred_region
        %s810 = smul.u32 32, %s18
        %p811 = scmp.lt.s32.totalorder %s810, 127
        %s812 = scalar_select %p811, %s810, 127
        %s813 = smul.addr %s812, 8
        %s814 = scalar_lea.vmem %s5, %s813
      $region56: #{sage_layer_pallas.2} parent=47 // pred_fallthru
        _
    $region48: #{sage_layer_pallas.2} parent=5 // pred_fallthru
      _
  $region6: #{sage_layer_pallas.2} parent=0 // loop_footer
    %s16 = sadd.s32 1, %s12
  $region7: #{sage_layer_pallas.2} parent=0 // loop_footer_branch
    %11 = sbr.rel target = $region3
  $region8: #{sage_layer_pallas.2} parent=0 // loop_exit
    _

// kernel: sage_layer_pallas.3
$region0: #{sage_layer_pallas.3}
  #allocation0 [shape = 'u32[]', space=smem, size = 0x4, offset = 0x4, fixed_abs, tag = 'smem constant byte address 0x4 - core index']
  #allocation1 [shape = 'u32[72,128]{1,0:T(1,128)}', space=vmem, size = 0x9000, scoped, tag = 'internal scratch']
  %s0 = inlined_call_operand.vmem [shape: bf16[1024,1024], index: 0, kind: input, shape index: {}]
  %s1 = inlined_call_operand.vmem [shape: bf16[1024,128], index: 1, kind: input, shape index: {}]
  %s2 = inlined_call_operand.vmem [shape: f32[1024,128], index: 2, kind: input, shape index: {}]
  %s3 = inlined_call_operand.vmem [shape: f32[1024,128], index: 3, kind: output, shape index: {}]
  %s4 = sld [smem:[#allocation0]]
  $region72: #{sage_layer_pallas.3} parent=0
    _
  %s6 = ssub.s32 1, %s4
  %s7 = scalar_select 0, %s6, %s4
  $region1: #{sage_layer_pallas.3} parent=0
    #allocation2 [shape = 'u8[524288]{0}', space=vmem, size = 0x80000, scoped, tag = 'input window, operand 0']
    loop: start=0, step=1, limit=10
    $region2: #{sage_layer_pallas.3} parent=1 // loop_pre_header
      _
    $region3: #{sage_layer_pallas.3} parent=1 // loop_header
      %s9 = sphi 0, %s13
      %p10 = scmp.ge.s32.totalorder %s9, 10
      %s16 = sphi 0, %s28
      %s17 = sphi 0, %s24
      %s18 = sphi 0, %s16
      %s19 = sphi 0, %s17
      %s20 = sphi 0, %s18
      %s21 = sphi 0, %s19
      %s33 = sphi 0, %s35
      %s36 = sphi 0, %s33
      %s37 = sphi 0, %s36
      %s53 = sphi 0, %s37
      %s59 = sphi 0, %s61
      %s62 = sphi 0, %s59
      %s63 = sphi 0, %s62
      %s79 = sphi 0, %s63
      %s85 = sphi 0, %s87
      %s88 = sphi 0, %s85
      %s89 = sphi 0, %s88
      %s105 = sphi 0, %s89
      %s111 = sphi 0, %s113
      %s114 = sphi 0, %s111
      %s115 = sphi 0, %s114
      %s131 = sphi 0, %s115
    $region4: #{sage_layer_pallas.3} parent=1 // loop_header_branch
      %12 = sbr.rel (%p10) target = $region8
    $region5: #{sage_layer_pallas.3} parent=1 // loop_body
      %s14 = ssub.s32 %s9, 1
      %s15 = ssub.s32 %s9, 2
      %s22 = sadd.s32 1, %s17
      %p23 = scmp.ge.s32.totalorder %s22, 2
      %s24 = scalar_select %p23, 0, %s22
      %s25 = sadd.s32 1, %s16
      %s26 = scalar_select %p23, %s25, %s16
      %p27 = scmp.ge.s32.totalorder %s26, 4
      %s28 = scalar_select %p27, 0, %s26
      %s29 = ssub.s32 %s16, %s28
      %s30 = ssub.s32 %s17, %s24
      %s31 = sor.u32 %s29, %s30
      %p32 = scmp.eq.s32.totalorder %s31, 0
      %s34 = sadd.s32 %s33, 1
      %s35 = scalar_select %p32, %s33, %s34
      %p38 = pneg %p32
      %p39 = scmp.eq.s32.totalorder %s9, 7
      %p40 = por %p38, %p39
      %p41 = scmp.ne.s32.totalorder %s33, %s36
      %p42 = scmp.eq.s32.totalorder %s9, 0
      %p43 = por %p41, %p42
      %p44 = scmp.ne.s32.totalorder %s33, %s36
      %p45 = scmp.eq.s32.totalorder %s14, 7
      %p46 = por %p44, %p45
      %p47 = scmp.ne.s32.totalorder %s36, %s37
      %p48 = scmp.eq.s32.totalorder %s14, 0
      %p49 = por %p47, %p48
      %p50 = scmp.ne.s32.totalorder %s36, %s37
      %p51 = scmp.eq.s32.totalorder %s15, 7
      %p52 = por %p50, %p51
      %p54 = scmp.ne.s32.totalorder %s37, %s53
      %p55 = scmp.eq.s32.totalorder %s15, 0
      %p56 = por %p54, %p55
      %s57 = ssub.s32 %s17, %s24
      %p58 = scmp.eq.s32.totalorder %s57, 0
      %s60 = sadd.s32 %s59, 1
      %s61 = scalar_select %p58, %s59, %s60
      %p64 = pneg %p58
      %p65 = scmp.eq.s32.totalorder %s9, 7
      %p66 = por %p64, %p65
      %p67 = scmp.ne.s32.totalorder %s59, %s62
      %p68 = scmp.eq.s32.totalorder %s9, 0
      %p69 = por %p67, %p68
      %p70 = scmp.ne.s32.totalorder %s59, %s62
      %p71 = scmp.eq.s32.totalorder %s14, 7
      %p72 = por %p70, %p71
      %p73 = scmp.ne.s32.totalorder %s62, %s63
      %p74 = scmp.eq.s32.totalorder %s14, 0
      %p75 = por %p73, %p74
      %p76 = scmp.ne.s32.totalorder %s62, %s63
      %p77 = scmp.eq.s32.totalorder %s15, 7
      %p78 = por %p76, %p77
      %p80 = scmp.ne.s32.totalorder %s63, %s79
      %p81 = scmp.eq.s32.totalorder %s15, 0
      %p82 = por %p80, %p81
      %s83 = ssub.s32 %s16, %s28
      %p84 = scmp.eq.s32.totalorder %s83, 0
      %s86 = sadd.s32 %s85, 1
      %s87 = scalar_select %p84, %s85, %s86
      %p90 = pneg %p84
      %p91 = scmp.eq.s32.totalorder %s9, 7
      %p92 = por %p90, %p91
      %p93 = scmp.ne.s32.totalorder %s85, %s88
      %p94 = scmp.eq.s32.totalorder %s9, 0
      %p95 = por %p93, %p94
      %p96 = scmp.ne.s32.totalorder %s85, %s88
      %p97 = scmp.eq.s32.totalorder %s14, 7
      %p98 = por %p96, %p97
      %p99 = scmp.ne.s32.totalorder %s88, %s89
      %p100 = scmp.eq.s32.totalorder %s14, 0
      %p101 = por %p99, %p100
      %p102 = scmp.ne.s32.totalorder %s88, %s89
      %p103 = scmp.eq.s32.totalorder %s15, 7
      %p104 = por %p102, %p103
      %p106 = scmp.ne.s32.totalorder %s89, %s105
      %p107 = scmp.eq.s32.totalorder %s15, 0
      %p108 = por %p106, %p107
      %s109 = ssub.s32 %s16, %s28
      %p110 = scmp.eq.s32.totalorder %s109, 0
      %s112 = sadd.s32 %s111, 1
      %s113 = scalar_select %p110, %s111, %s112
      %p116 = pneg %p110
      %p117 = scmp.eq.s32.totalorder %s9, 7
      %p118 = por %p116, %p117
      %p119 = scmp.ne.s32.totalorder %s111, %s114
      %p120 = scmp.eq.s32.totalorder %s9, 0
      %p121 = por %p119, %p120
      %p122 = scmp.ne.s32.totalorder %s111, %s114
      %p123 = scmp.eq.s32.totalorder %s14, 7
      %p124 = por %p122, %p123
      %p125 = scmp.ne.s32.totalorder %s114, %s115
      %p126 = scmp.eq.s32.totalorder %s14, 0
      %p127 = por %p125, %p126
      %p128 = scmp.ne.s32.totalorder %s114, %s115
      %p129 = scmp.eq.s32.totalorder %s15, 7
      %p130 = por %p128, %p129
      %p132 = scmp.ne.s32.totalorder %s115, %s131
      %p133 = scmp.eq.s32.totalorder %s15, 0
      %p134 = por %p132, %p133
      %p135 = scmp.le.s32.totalorder 1, %s9
      %p136 = scmp.lt.s32.totalorder %s9, 9
      %p137 = pnand %p135, %p136
      %p138 = pneg %p137
      // Predicated region
      $region9: #{sage_layer_pallas.3} parent=5 // pred_check
        _
      $region10: #{sage_layer_pallas.3} parent=5 // pred_check_branch
        %140 = sbr.rel (%p137) target = $region12
      $region11: #{sage_layer_pallas.3} parent=5 // pred_region
        %s141 = ssub.s32 %s9, 1
      $region12: #{sage_layer_pallas.3} parent=5 // pred_fallthru
        _
      %p142 = scmp.lt.s32.totalorder %s9, 8
      // Predicated region
      $region13: #{sage_layer_pallas.3} parent=5 // pred_check
        %p143 = pneg %p142
      $region14: #{sage_layer_pallas.3} parent=5 // pred_check_branch
        %145 = sbr.rel (%p143) target = $region16
      $region15: #{sage_layer_pallas.3} parent=5 // pred_region
        // Predicated region
        $region17: #{sage_layer_pallas.3} parent=15 // pred_check
          %p146 = pneg %p43
        $region18: #{sage_layer_pallas.3} parent=15 // pred_check_branch
          %148 = sbr.rel (%p146) target = $region20
        $region19: #{sage_layer_pallas.3} parent=15 // pred_region
          %s149 = sand.u32 %s33, 1
          %s150 = sand.u32 %s33, 1
          %s151 = smul.addr %s150, 512
          %s152 = scalar_lea.vmem [#allocation2], %s151
          %s153 = smul.u32 32, %s16
          %s154 = smul.u32 4, %s17
          %s155 = smul.addr %s153, 8
          %s156 = sadd.s32 %s154, %s155
          %s157 = smul.addr %s156, 4
          %s158 = scalar_lea.vmem %s0, %s157
          // Predicated region
          $region21: #{sage_layer_pallas.3} parent=19 // pred_check
            _
          $region22: #{sage_layer_pallas.3} parent=19 // pred_check_branch
            %160 = sbr.rel (0) target = $region24
          $region23: #{sage_layer_pallas.3} parent=19 // pred_region
            // Predicated region
            $region25: #{sage_layer_pallas.3} parent=23 // pred_check
              _
            $region26: #{sage_layer_pallas.3} parent=23 // pred_check_branch
              %162 = sbr.rel (0) target = $region28
            $region27: #{sage_layer_pallas.3} parent=23 // pred_region
              loop: start=0, step=1, limit=1
              $region29: #{sage_layer_pallas.3} parent=27 // loop_pre_header
                _
              $region30: #{sage_layer_pallas.3} parent=27 // loop_header
                %s164 = sphi 0, %s168
                %p165 = scmp.ge.s32.totalorder %s164, 1
                %s169 = sphi %s158, %s158
                %s170 = sphi %s152, %s152
              $region31: #{sage_layer_pallas.3} parent=27 // loop_header_branch
                %167 = sbr.rel (%p165) target = $region35
              $region32: #{sage_layer_pallas.3} parent=27 // loop_body
                %v171 = vld [vmem:[%s169] sm:$0xff]
                %172 = vst [vmem:[%s170] sm:$0xff] %v171
                %v173 = vld [vmem:[%s169 + $0x8] sm:$0xff]
                %174 = vst [vmem:[%s170 + $0x8] sm:$0xff] %v173
                %v175 = vld [vmem:[%s169 + $0x20] sm:$0xff]
                %176 = vst [vmem:[%s170 + $0x10] sm:$0xff] %v175
                %v177 = vld [vmem:[%s169 + $0x28] sm:$0xff]
                %178 = vst [vmem:[%s170 + $0x18] sm:$0xff] %v177
                %v179 = vld [vmem:[%s169 + $0x40] sm:$0xff]
                %180 = vst [vmem:[%s170 + $0x20] sm:$0xff] %v179
                %v181 = vld [vmem:[%s169 + $0x48] sm:$0xff]
                %182 = vst [vmem:[%s170 + $0x28] sm:$0xff] %v181
                %v183 = vld [vmem:[%s169 + $0x60] sm:$0xff]
                %184 = vst [vmem:[%s170 + $0x30] sm:$0xff] %v183
                %v185 = vld [vmem:[%s169 + $0x68] sm:$0xff]
                %186 = vst [vmem:[%s170 + $0x38] sm:$0xff] %v185
                %v187 = vld [vmem:[%s169 + $0x80] sm:$0xff]
                %188 = vst [vmem:[%s170 + $0x40] sm:$0xff] %v187
                %v189 = vld [vmem:[%s169 + $0x88] sm:$0xff]
                %190 = vst [vmem:[%s170 + $0x48] sm:$0xff] %v189
                %v191 = vld [vmem:[%s169 + $0xa0] sm:$0xff]
                %192 = vst [vmem:[%s170 + $0x50] sm:$0xff] %v191
                %v193 = vld [vmem:[%s169 + $0xa8] sm:$0xff]
                %194 = vst [vmem:[%s170 + $0x58] sm:$0xff] %v193
                %v195 = vld [vmem:[%s169 + $0xc0] sm:$0xff]
                %196 = vst [vmem:[%s170 + $0x60] sm:$0xff] %v195
                %v197 = vld [vmem:[%s169 + $0xc8] sm:$0xff]
                %198 = vst [vmem:[%s170 + $0x68] sm:$0xff] %v197
                %v199 = vld [vmem:[%s169 + $0xe0] sm:$0xff]
                %200 = vst [vmem:[%s170 + $0x70] sm:$0xff] %v199
                %v201 = vld [vmem:[%s169 + $0xe8] sm:$0xff]
                %202 = vst [vmem:[%s170 + $0x78] sm:$0xff] %v201
                %v203 = vld [vmem:[%s169 + $0x100] sm:$0xff]
                %204 = vst [vmem:[%s170 + $0x80] sm:$0xff] %v203
                %v205 = vld [vmem:[%s169 + $0x108] sm:$0xff]
                %206 = vst [vmem:[%s170 + $0x88] sm:$0xff] %v205
                %v207 = vld [vmem:[%s169 + $0x120] sm:$0xff]
                %208 = vst [vmem:[%s170 + $0x90] sm:$0xff] %v207
                %v209 = vld [vmem:[%s169 + $0x128] sm:$0xff]
                %210 = vst [vmem:[%s170 + $0x98] sm:$0xff] %v209
                %v211 = vld [vmem:[%s169 + $0x140] sm:$0xff]
                %212 = vst [vmem:[%s170 + $0xa0] sm:$0xff] %v211
                %v213 = vld [vmem:[%s169 + $0x148] sm:$0xff]
                %214 = vst [vmem:[%s170 + $0xa8] sm:$0xff] %v213
                %v215 = vld [vmem:[%s169 + $0x160] sm:$0xff]
                %216 = vst [vmem:[%s170 + $0xb0] sm:$0xff] %v215
                %v217 = vld [vmem:[%s169 + $0x168] sm:$0xff]
                %218 = vst [vmem:[%s170 + $0xb8] sm:$0xff] %v217
                %v219 = vld [vmem:[%s169 + $0x180] sm:$0xff]
                %220 = vst [vmem:[%s170 + $0xc0] sm:$0xff] %v219
                %v221 = vld [vmem:[%s169 + $0x188] sm:$0xff]
                %222 = vst [vmem:[%s170 + $0xc8] sm:$0xff] %v221
                %v223 = vld [vmem:[%s169 + $0x1a0] sm:$0xff]
                %224 = vst [vmem:[%s170 + $0xd0] sm:$0xff] %v223
                %v225 = vld [vmem:[%s169 + $0x1a8] sm:$0xff]
                %226 = vst [vmem:[%s170 + $0xd8] sm:$0xff] %v225
                %v227 = vld [vmem:[%s169 + $0x1c0] sm:$0xff]
                %228 = vst [vmem:[%s170 + $0xe0] sm:$0xff] %v227
                %v229 = vld [vmem:[%s169 + $0x1c8] sm:$0xff]
                %230 = vst [vmem:[%s170 + $0xe8] sm:$0xff] %v229
                %v231 = vld [vmem:[%s169 + $0x1e0] sm:$0xff]
                %232 = vst [vmem:[%s170 + $0xf0] sm:$0xff] %v231
                %v233 = vld [vmem:[%s169 + $0x1e8] sm:$0xff]
                %234 = vst [vmem:[%s170 + $0xf8] sm:$0xff] %v233
                %v235 = vld [vmem:[%s169 + $0x200] sm:$0xff]
                %236 = vst [vmem:[%s170 + $0x100] sm:$0xff] %v235
                %v237 = vld [vmem:[%s169 + $0x208] sm:$0xff]
                %238 = vst [vmem:[%s170 + $0x108] sm:$0xff] %v237
                %v239 = vld [vmem:[%s169 + $0x220] sm:$0xff]
                %240 = vst [vmem:[%s170 + $0x110] sm:$0xff] %v239
                %v241 = vld [vmem:[%s169 + $0x228] sm:$0xff]
                %242 = vst [vmem:[%s170 + $0x118] sm:$0xff] %v241
                %v243 = vld [vmem:[%s169 + $0x240] sm:$0xff]
                %244 = vst [vmem:[%s170 + $0x120] sm:$0xff] %v243
                %v245 = vld [vmem:[%s169 + $0x248] sm:$0xff]
                %246 = vst [vmem:[%s170 + $0x128] sm:$0xff] %v245
                %v247 = vld [vmem:[%s169 + $0x260] sm:$0xff]
                %248 = vst [vmem:[%s170 + $0x130] sm:$0xff] %v247
                %v249 = vld [vmem:[%s169 + $0x268] sm:$0xff]
                %250 = vst [vmem:[%s170 + $0x138] sm:$0xff] %v249
                %v251 = vld [vmem:[%s169 + $0x280] sm:$0xff]
                %252 = vst [vmem:[%s170 + $0x140] sm:$0xff] %v251
                %v253 = vld [vmem:[%s169 + $0x288] sm:$0xff]
                %254 = vst [vmem:[%s170 + $0x148] sm:$0xff] %v253
                %v255 = vld [vmem:[%s169 + $0x2a0] sm:$0xff]
                %256 = vst [vmem:[%s170 + $0x150] sm:$0xff] %v255
                %v257 = vld [vmem:[%s169 + $0x2a8] sm:$0xff]
                %258 = vst [vmem:[%s170 + $0x158] sm:$0xff] %v257
                %v259 = vld [vmem:[%s169 + $0x2c0] sm:$0xff]
                %260 = vst [vmem:[%s170 + $0x160] sm:$0xff] %v259
                %v261 = vld [vmem:[%s169 + $0x2c8] sm:$0xff]
                %262 = vst [vmem:[%s170 + $0x168] sm:$0xff] %v261
                %v263 = vld [vmem:[%s169 + $0x2e0] sm:$0xff]
                %264 = vst [vmem:[%s170 + $0x170] sm:$0xff] %v263
                %v265 = vld [vmem:[%s169 + $0x2e8] sm:$0xff]
                %266 = vst [vmem:[%s170 + $0x178] sm:$0xff] %v265
                %v267 = vld [vmem:[%s169 + $0x300] sm:$0xff]
                %268 = vst [vmem:[%s170 + $0x180] sm:$0xff] %v267
                %v269 = vld [vmem:[%s169 + $0x308] sm:$0xff]
                %270 = vst [vmem:[%s170 + $0x188] sm:$0xff] %v269
                %v271 = vld [vmem:[%s169 + $0x320] sm:$0xff]
                %272 = vst [vmem:[%s170 + $0x190] sm:$0xff] %v271
                %v273 = vld [vmem:[%s169 + $0x328] sm:$0xff]
                %274 = vst [vmem:[%s170 + $0x198] sm:$0xff] %v273
                %v275 = vld [vmem:[%s169 + $0x340] sm:$0xff]
                %276 = vst [vmem:[%s170 + $0x1a0] sm:$0xff] %v275
                %v277 = vld [vmem:[%s169 + $0x348] sm:$0xff]
                %278 = vst [vmem:[%s170 + $0x1a8] sm:$0xff] %v277
                %v279 = vld [vmem:[%s169 + $0x360] sm:$0xff]
                %280 = vst [vmem:[%s170 + $0x1b0] sm:$0xff] %v279
                %v281 = vld [vmem:[%s169 + $0x368] sm:$0xff]
                %282 = vst [vmem:[%s170 + $0x1b8] sm:$0xff] %v281
                %v283 = vld [vmem:[%s169 + $0x380] sm:$0xff]
                %284 = vst [vmem:[%s170 + $0x1c0] sm:$0xff] %v283
                %v285 = vld [vmem:[%s169 + $0x388] sm:$0xff]
                %286 = vst [vmem:[%s170 + $0x1c8] sm:$0xff] %v285
                %v287 = vld [vmem:[%s169 + $0x3a0] sm:$0xff]
                %288 = vst [vmem:[%s170 + $0x1d0] sm:$0xff] %v287
                %v289 = vld [vmem:[%s169 + $0x3a8] sm:$0xff]
                %290 = vst [vmem:[%s170 + $0x1d8] sm:$0xff] %v289
                %v291 = vld [vmem:[%s169 + $0x3c0] sm:$0xff]
                %292 = vst [vmem:[%s170 + $0x1e0] sm:$0xff] %v291
                %v293 = vld [vmem:[%s169 + $0x3c8] sm:$0xff]
                %294 = vst [vmem:[%s170 + $0x1e8] sm:$0xff] %v293
                %v295 = vld [vmem:[%s169 + $0x3e0] sm:$0xff]
                %296 = vst [vmem:[%s170 + $0x1f0] sm:$0xff] %v295
                %v297 = vld [vmem:[%s169 + $0x3e8] sm:$0xff]
                %298 = vst [vmem:[%s170 + $0x1f8] sm:$0xff] %v297
              $region33: #{sage_layer_pallas.3} parent=27 // loop_footer
                %s168 = sadd.s32 1, %s164
              $region34: #{sage_layer_pallas.3} parent=27 // loop_footer_branch
                %163 = sbr.rel target = $region30
              $region35: #{sage_layer_pallas.3} parent=27 // loop_exit
                _
            $region28: #{sage_layer_pallas.3} parent=23 // pred_fallthru
              _
            // Predicated region
            $region36: #{sage_layer_pallas.3} parent=23 // pred_check
              _
            $region37: #{sage_layer_pallas.3} parent=23 // pred_check_branch
              %300 = sbr.rel target = $region39
            $region38: #{sage_layer_pallas.3} parent=23 // pred_region
              _
            $region39: #{sage_layer_pallas.3} parent=23 // pred_fallthru
              _
          $region24: #{sage_layer_pallas.3} parent=19 // pred_fallthru
            _
          %301 = vnop
        $region20: #{sage_layer_pallas.3} parent=15 // pred_fallthru
          _
        // Predicated region
        $region40: #{sage_layer_pallas.3} parent=15 // pred_check
          %p302 = pneg %p69
        $region41: #{sage_layer_pallas.3} parent=15 // pred_check_branch
          %304 = sbr.rel (%p302) target = $region43
        $region42: #{sage_layer_pallas.3} parent=15 // pred_region
          %s305 = smul.u32 64, %s17
          %p306 = scmp.lt.s32.totalorder %s305, 127
          %s307 = scalar_select %p306, %s305, 127
          %s308 = smul.addr %s307, 4
          %s309 = scalar_lea.vmem %s1, %s308
          %s310 = smul.u32 64, %s17
        $region43: #{sage_layer_pallas.3} parent=15 // pred_fallthru
          _
        // Predicated region
        $region44: #{sage_layer_pallas.3} parent=15 // pred_check
          %p311 = pneg %p95
        $region45: #{sage_layer_pallas.3} parent=15 // pred_check_branch
          %313 = sbr.rel (%p311) target = $region47
        $region46: #{sage_layer_pallas.3} parent=15 // pred_region
          %s314 = smul.u32 32, %s16
          %p315 = scmp.lt.s32.totalorder %s314, 127
          %s316 = scalar_select %p315, %s314, 127
          %s317 = smul.addr %s316, 8
          %s318 = scalar_lea.vmem %s2, %s317
          %s319 = smul.u32 32, %s16
        $region47: #{sage_layer_pallas.3} parent=15 // pred_fallthru
          _
      $region16: #{sage_layer_pallas.3} parent=5 // pred_fallthru
        _
      %p320 = scmp.le.s32.totalorder 1, %s9
      %p321 = scmp.lt.s32.totalorder %s9, 9
      %p322 = pnand %p320, %p321
      %p323 = pneg %p322
      // Predicated region
      $region48: #{sage_layer_pallas.3} parent=5 // pred_check
        _
      $region49: #{sage_layer_pallas.3} parent=5 // pred_check_branch
        %325 = sbr.rel (%p322) target = $region51
      $region50: #{sage_layer_pallas.3} parent=5 // pred_region
        %s326 = ssub.s32 %s9, 1
        %s327 = sand.u32 %s36, 1
        %s328 = sand.u32 %s36, 1
        %s329 = smul.addr %s328, 512
        %s330 = scalar_lea.vmem [#allocation2], %s329
        // Predicated region
        $region52: #{sage_layer_pallas.3} parent=50 // pred_check
          %p331 = pneg %p49
        $region53: #{sage_layer_pallas.3} parent=50 // pred_check_branch
          %333 = sbr.rel (%p331) target = $region55
        $region54: #{sage_layer_pallas.3} parent=50 // pred_region
          _
        $region55: #{sage_layer_pallas.3} parent=50 // pred_fallthru
          _
        %s334 = sand.u32 %s36, 1
        %s335 = sand.u32 %s36, 1
        %s336 = smul.addr %s335, 512
        %s337 = scalar_lea.vmem [#allocation2], %s336
        %p338 = pneg %p49
        %p339 = pneg %p46
        %s340 = smul.u32 64, %s19
        %p341 = scmp.lt.s32.totalorder %s340, 127
        %s342 = scalar_select %p341, %s340, 127
        %s343 = smul.addr %s342, 4
        %s344 = scalar_lea.vmem %s1, %s343
        %p345 = pneg %p75
        %p346 = pneg %p72
        %s347 = smul.u32 32, %s18
        %p348 = scmp.lt.s32.totalorder %s347, 127
        %s349 = scalar_select %p348, %s347, 127
        %s350 = smul.addr %s349, 8
        %s351 = scalar_lea.vmem %s2, %s350
        %p352 = pneg %p101
        %p353 = pneg %p98
        %p354 = pneg %p127
        %p355 = pneg %p124
        %s356 = smul.u32 32, %s18
        %p357 = scmp.lt.s32.totalorder %s356, 127
        %s358 = scalar_select %p357, %s356, 127
        %s359 = smul.addr %s358, 8
        %s360 = scalar_lea.vmem %s3, %s359
        %s361 = smul.u32 32, %s18
        %s362 = smul.u32 4, %s19
        %s363 = smul.u32 64, %s19
        %p364 = scmp.lt.s32.totalorder %s363, 127
        %s365 = scalar_select %p364, %s363, 127
        %s366 = smul.addr %s365, 4
        %s367 = scalar_lea.vmem %s1, %s366
        %s368 = smul.u32 64, %s19
        %s369 = smul.u32 32, %s18
        %p370 = scmp.lt.s32.totalorder %s369, 127
        %s371 = scalar_select %p370, %s369, 127
        %s372 = smul.addr %s371, 8
        %s373 = scalar_lea.vmem %s2, %s372
        %s374 = smul.u32 32, %s18
        %s375 = smul.u32 32, %s18
        %p376 = scmp.lt.s32.totalorder %s375, 127
        %s377 = scalar_select %p376, %s375, 127
        %s378 = smul.addr %s377, 8
        %s379 = scalar_lea.vmem %s3, %s378
        %s380 = smul.u32 32, %s18
        %p381 = scmp.eq.s32.totalorder %s19, 0
        // Predicated region
        $region56: #{sage_layer_pallas.3} parent=50 // pred_check
          %p382 = pneg %p381
        $region57: #{sage_layer_pallas.3} parent=50 // pred_check_branch
          %384 = sbr.rel (%p382) target = $region59
        $region58: #{sage_layer_pallas.3} parent=50 // pred_region
          %v385 = vld [vmem:[%s373] sm:$0xff]
          %v386 = vld [vmem:[%s373 + $0x8] sm:$0xff]
          %v387 = vld [vmem:[%s373 + $0x10] sm:$0xff]
          %v388 = vld [vmem:[%s373 + $0x18] sm:$0xff]
          %v389 = vld [vmem:[%s373 + $0x20] sm:$0xff]
          %v390 = vld [vmem:[%s373 + $0x28] sm:$0xff]
          %v391 = vld [vmem:[%s373 + $0x30] sm:$0xff]
          %v392 = vld [vmem:[%s373 + $0x38] sm:$0xff]
          %v393 = vld [vmem:[%s373 + $0x40] sm:$0xff]
          %v394 = vld [vmem:[%s373 + $0x48] sm:$0xff]
          %v395 = vld [vmem:[%s373 + $0x50] sm:$0xff]
          %v396 = vld [vmem:[%s373 + $0x58] sm:$0xff]
          %v397 = vld [vmem:[%s373 + $0x60] sm:$0xff]
          %v398 = vld [vmem:[%s373 + $0x68] sm:$0xff]
          %v399 = vld [vmem:[%s373 + $0x70] sm:$0xff]
          %v400 = vld [vmem:[%s373 + $0x78] sm:$0xff]
          %v401 = vld [vmem:[%s373 + $0x80] sm:$0xff]
          %v402 = vld [vmem:[%s373 + $0x88] sm:$0xff]
          %v403 = vld [vmem:[%s373 + $0x90] sm:$0xff]
          %v404 = vld [vmem:[%s373 + $0x98] sm:$0xff]
          %v405 = vld [vmem:[%s373 + $0xa0] sm:$0xff]
          %v406 = vld [vmem:[%s373 + $0xa8] sm:$0xff]
          %v407 = vld [vmem:[%s373 + $0xb0] sm:$0xff]
          %v408 = vld [vmem:[%s373 + $0xb8] sm:$0xff]
          %v409 = vld [vmem:[%s373 + $0xc0] sm:$0xff]
          %v410 = vld [vmem:[%s373 + $0xc8] sm:$0xff]
          %v411 = vld [vmem:[%s373 + $0xd0] sm:$0xff]
          %v412 = vld [vmem:[%s373 + $0xd8] sm:$0xff]
          %v413 = vld [vmem:[%s373 + $0xe0] sm:$0xff]
          %v414 = vld [vmem:[%s373 + $0xe8] sm:$0xff]
          %v415 = vld [vmem:[%s373 + $0xf0] sm:$0xff]
          %v416 = vld [vmem:[%s373 + $0xf8] sm:$0xff]
          %417 = vst [vmem:[%s379] sm:$0xff] %v385
          %418 = vst [vmem:[%s379 + $0x8] sm:$0xff] %v386
          %419 = vst [vmem:[%s379 + $0x10] sm:$0xff] %v387
          %420 = vst [vmem:[%s379 + $0x18] sm:$0xff] %v388
          %421 = vst [vmem:[%s379 + $0x20] sm:$0xff] %v389
          %422 = vst [vmem:[%s379 + $0x28] sm:$0xff] %v390
          %423 = vst [vmem:[%s379 + $0x30] sm:$0xff] %v391
          %424 = vst [vmem:[%s379 + $0x38] sm:$0xff] %v392
          %425 = vst [vmem:[%s379 + $0x40] sm:$0xff] %v393
          %426 = vst [vmem:[%s379 + $0x48] sm:$0xff] %v394
          %427 = vst [vmem:[%s379 + $0x50] sm:$0xff] %v395
          %428 = vst [vmem:[%s379 + $0x58] sm:$0xff] %v396
          %429 = vst [vmem:[%s379 + $0x60] sm:$0xff] %v397
          %430 = vst [vmem:[%s379 + $0x68] sm:$0xff] %v398
          %431 = vst [vmem:[%s379 + $0x70] sm:$0xff] %v399
          %432 = vst [vmem:[%s379 + $0x78] sm:$0xff] %v400
          %433 = vst [vmem:[%s379 + $0x80] sm:$0xff] %v401
          %434 = vst [vmem:[%s379 + $0x88] sm:$0xff] %v402
          %435 = vst [vmem:[%s379 + $0x90] sm:$0xff] %v403
          %436 = vst [vmem:[%s379 + $0x98] sm:$0xff] %v404
          %437 = vst [vmem:[%s379 + $0xa0] sm:$0xff] %v405
          %438 = vst [vmem:[%s379 + $0xa8] sm:$0xff] %v406
          %439 = vst [vmem:[%s379 + $0xb0] sm:$0xff] %v407
          %440 = vst [vmem:[%s379 + $0xb8] sm:$0xff] %v408
          %441 = vst [vmem:[%s379 + $0xc0] sm:$0xff] %v409
          %442 = vst [vmem:[%s379 + $0xc8] sm:$0xff] %v410
          %443 = vst [vmem:[%s379 + $0xd0] sm:$0xff] %v411
          %444 = vst [vmem:[%s379 + $0xd8] sm:$0xff] %v412
          %445 = vst [vmem:[%s379 + $0xe0] sm:$0xff] %v413
          %446 = vst [vmem:[%s379 + $0xe8] sm:$0xff] %v414
          %447 = vst [vmem:[%s379 + $0xf0] sm:$0xff] %v415
          %448 = vst [vmem:[%s379 + $0xf8] sm:$0xff] %v416
        $region59: #{sage_layer_pallas.3} parent=50 // pred_fallthru
          _
        %v449 = vld [vmem:[%s379] sm:$0xff]
        %v450 = vld [vmem:[%s379 + $0x8] sm:$0xff]
        %v451 = vld [vmem:[%s379 + $0x10] sm:$0xff]
        %v452 = vld [vmem:[%s379 + $0x18] sm:$0xff]
        %v453 = vld [vmem:[%s379 + $0x20] sm:$0xff]
        %v454 = vld [vmem:[%s379 + $0x28] sm:$0xff]
        %v455 = vld [vmem:[%s379 + $0x30] sm:$0xff]
        %v456 = vld [vmem:[%s379 + $0x38] sm:$0xff]
        %v457 = vld [vmem:[%s379 + $0x40] sm:$0xff]
        %v458 = vld [vmem:[%s379 + $0x48] sm:$0xff]
        %v459 = vld [vmem:[%s379 + $0x50] sm:$0xff]
        %v460 = vld [vmem:[%s379 + $0x58] sm:$0xff]
        %v461 = vld [vmem:[%s379 + $0x60] sm:$0xff]
        %v462 = vld [vmem:[%s379 + $0x68] sm:$0xff]
        %v463 = vld [vmem:[%s379 + $0x70] sm:$0xff]
        %v464 = vld [vmem:[%s379 + $0x78] sm:$0xff]
        %v465 = vld [vmem:[%s379 + $0x80] sm:$0xff]
        %v466 = vld [vmem:[%s379 + $0x88] sm:$0xff]
        %v467 = vld [vmem:[%s379 + $0x90] sm:$0xff]
        %v468 = vld [vmem:[%s379 + $0x98] sm:$0xff]
        %v469 = vld [vmem:[%s379 + $0xa0] sm:$0xff]
        %v470 = vld [vmem:[%s379 + $0xa8] sm:$0xff]
        %v471 = vld [vmem:[%s379 + $0xb0] sm:$0xff]
        %v472 = vld [vmem:[%s379 + $0xb8] sm:$0xff]
        %v473 = vld [vmem:[%s379 + $0xc0] sm:$0xff]
        %v474 = vld [vmem:[%s379 + $0xc8] sm:$0xff]
        %v475 = vld [vmem:[%s379 + $0xd0] sm:$0xff]
        %v476 = vld [vmem:[%s379 + $0xd8] sm:$0xff]
        %v477 = vld [vmem:[%s379 + $0xe0] sm:$0xff]
        %v478 = vld [vmem:[%s379 + $0xe8] sm:$0xff]
        %v479 = vld [vmem:[%s379 + $0xf0] sm:$0xff]
        %v480 = vld [vmem:[%s379 + $0xf8] sm:$0xff]
        %v481 = vld [vmem:[%s330] sm:$0xff]
        %v482 = vld [vmem:[%s330 + $0x8] sm:$0xff]
        %v483 = vld [vmem:[%s330 + $0x10] sm:$0xff]
        %v484 = vld [vmem:[%s330 + $0x18] sm:$0xff]
        %v485 = vld [vmem:[%s330 + $0x20] sm:$0xff]
        %v486 = vld [vmem:[%s330 + $0x28] sm:$0xff]
        %v487 = vld [vmem:[%s330 + $0x30] sm:$0xff]
        %v488 = vld [vmem:[%s330 + $0x38] sm:$0xff]
        %v489 = vld [vmem:[%s330 + $0x40] sm:$0xff]
        %v490 = vld [vmem:[%s330 + $0x48] sm:$0xff]
        %v491 = vld [vmem:[%s330 + $0x50] sm:$0xff]
        %v492 = vld [vmem:[%s330 + $0x58] sm:$0xff]
        %v493 = vld [vmem:[%s330 + $0x60] sm:$0xff]
        %v494 = vld [vmem:[%s330 + $0x68] sm:$0xff]
        %v495 = vld [vmem:[%s330 + $0x70] sm:$0xff]
        %v496 = vld [vmem:[%s330 + $0x78] sm:$0xff]
        %v497 = vld [vmem:[%s330 + $0x80] sm:$0xff]
        %v498 = vld [vmem:[%s330 + $0x88] sm:$0xff]
        %v499 = vld [vmem:[%s330 + $0x90] sm:$0xff]
        %v500 = vld [vmem:[%s330 + $0x98] sm:$0xff]
        %v501 = vld [vmem:[%s330 + $0xa0] sm:$0xff]
        %v502 = vld [vmem:[%s330 + $0xa8] sm:$0xff]
        %v503 = vld [vmem:[%s330 + $0xb0] sm:$0xff]
        %v504 = vld [vmem:[%s330 + $0xb8] sm:$0xff]
        %v505 = vld [vmem:[%s330 + $0xc0] sm:$0xff]
        %v506 = vld [vmem:[%s330 + $0xc8] sm:$0xff]
        %v507 = vld [vmem:[%s330 + $0xd0] sm:$0xff]
        %v508 = vld [vmem:[%s330 + $0xd8] sm:$0xff]
        %v509 = vld [vmem:[%s330 + $0xe0] sm:$0xff]
        %v510 = vld [vmem:[%s330 + $0xe8] sm:$0xff]
        %v511 = vld [vmem:[%s330 + $0xf0] sm:$0xff]
        %v512 = vld [vmem:[%s330 + $0xf8] sm:$0xff]
        %v513 = vld [vmem:[%s330 + $0x100] sm:$0xff]
        %v514 = vld [vmem:[%s330 + $0x108] sm:$0xff]
        %v515 = vld [vmem:[%s330 + $0x110] sm:$0xff]
        %v516 = vld [vmem:[%s330 + $0x118] sm:$0xff]
        %v517 = vld [vmem:[%s330 + $0x120] sm:$0xff]
        %v518 = vld [vmem:[%s330 + $0x128] sm:$0xff]
        %v519 = vld [vmem:[%s330 + $0x130] sm:$0xff]
        %v520 = vld [vmem:[%s330 + $0x138] sm:$0xff]
        %v521 = vld [vmem:[%s330 + $0x140] sm:$0xff]
        %v522 = vld [vmem:[%s330 + $0x148] sm:$0xff]
        %v523 = vld [vmem:[%s330 + $0x150] sm:$0xff]
        %v524 = vld [vmem:[%s330 + $0x158] sm:$0xff]
        %v525 = vld [vmem:[%s330 + $0x160] sm:$0xff]
        %v526 = vld [vmem:[%s330 + $0x168] sm:$0xff]
        %v527 = vld [vmem:[%s330 + $0x170] sm:$0xff]
        %v528 = vld [vmem:[%s330 + $0x178] sm:$0xff]
        %v529 = vld [vmem:[%s330 + $0x180] sm:$0xff]
        %v530 = vld [vmem:[%s330 + $0x188] sm:$0xff]
        %v531 = vld [vmem:[%s330 + $0x190] sm:$0xff]
        %v532 = vld [vmem:[%s330 + $0x198] sm:$0xff]
        %v533 = vld [vmem:[%s330 + $0x1a0] sm:$0xff]
        %v534 = vld [vmem:[%s330 + $0x1a8] sm:$0xff]
        %v535 = vld [vmem:[%s330 + $0x1b0] sm:$0xff]
        %v536 = vld [vmem:[%s330 + $0x1b8] sm:$0xff]
        %v537 = vld [vmem:[%s330 + $0x1c0] sm:$0xff]
        %v538 = vld [vmem:[%s330 + $0x1c8] sm:$0xff]
        %v539 = vld [vmem:[%s330 + $0x1d0] sm:$0xff]
        %v540 = vld [vmem:[%s330 + $0x1d8] sm:$0xff]
        %v541 = vld [vmem:[%s330 + $0x1e0] sm:$0xff]
        %v542 = vld [vmem:[%s330 + $0x1e8] sm:$0xff]
        %v543 = vld [vmem:[%s330 + $0x1f0] sm:$0xff]
        %v544 = vld [vmem:[%s330 + $0x1f8] sm:$0xff]
        %v545 = vld [vmem:[%s367] sm:$0xf]
        %v546 = vld [vmem:[%s367 + $0x4] sm:$0xf]
        %v547 = vld [vmem:[%s367 + $0x8] sm:$0xf]
        %v548 = vld [vmem:[%s367 + $0xc] sm:$0xf]
        %v549 = vld [vmem:[%s367 + $0x10] sm:$0xf]
        %v550 = vld [vmem:[%s367 + $0x14] sm:$0xf]
        %v551 = vld [vmem:[%s367 + $0x18] sm:$0xf]
        %v552 = vld [vmem:[%s367 + $0x1c] sm:$0xf]
        %v553 = vld [vmem:[%s367 + $0x20] sm:$0xf]
        %v554 = vld [vmem:[%s367 + $0x24] sm:$0xf]
        %v555 = vld [vmem:[%s367 + $0x28] sm:$0xf]
        %v556 = vld [vmem:[%s367 + $0x2c] sm:$0xf]
        %v557 = vld [vmem:[%s367 + $0x30] sm:$0xf]
        %v558 = vld [vmem:[%s367 + $0x34] sm:$0xf]
        %v559 = vld [vmem:[%s367 + $0x38] sm:$0xf]
        %v560 = vld [vmem:[%s367 + $0x3c] sm:$0xf]
        %v561 = vld [vmem:[%s367 + $0x40] sm:$0xf]
        %v562 = vld [vmem:[%s367 + $0x44] sm:$0xf]
        %v563 = vld [vmem:[%s367 + $0x48] sm:$0xf]
        %v564 = vld [vmem:[%s367 + $0x4c] sm:$0xf]
        %v565 = vld [vmem:[%s367 + $0x50] sm:$0xf]
        %v566 = vld [vmem:[%s367 + $0x54] sm:$0xf]
        %v567 = vld [vmem:[%s367 + $0x58] sm:$0xf]
        %v568 = vld [vmem:[%s367 + $0x5c] sm:$0xf]
        %v569 = vld [vmem:[%s367 + $0x60] sm:$0xf]
        %v570 = vld [vmem:[%s367 + $0x64] sm:$0xf]
        %v571 = vld [vmem:[%s367 + $0x68] sm:$0xf]
        %v572 = vld [vmem:[%s367 + $0x6c] sm:$0xf]
        %v573 = vld [vmem:[%s367 + $0x70] sm:$0xf]
        %v574 = vld [vmem:[%s367 + $0x74] sm:$0xf]
        %v575 = vld [vmem:[%s367 + $0x78] sm:$0xf]
        %v576 = vld [vmem:[%s367 + $0x7c] sm:$0xf]
        %v577 = vld [vmem:[%s367 + $0x80] sm:$0xf]
        %v578 = vld [vmem:[%s367 + $0x84] sm:$0xf]
        %v579 = vld [vmem:[%s367 + $0x88] sm:$0xf]
        %v580 = vld [vmem:[%s367 + $0x8c] sm:$0xf]
        %v581 = vld [vmem:[%s367 + $0x90] sm:$0xf]
        %v582 = vld [vmem:[%s367 + $0x94] sm:$0xf]
        %v583 = vld [vmem:[%s367 + $0x98] sm:$0xf]
        %v584 = vld [vmem:[%s367 + $0x9c] sm:$0xf]
        %v585 = vld [vmem:[%s367 + $0xa0] sm:$0xf]
        %v586 = vld [vmem:[%s367 + $0xa4] sm:$0xf]
        %v587 = vld [vmem:[%s367 + $0xa8] sm:$0xf]
        %v588 = vld [vmem:[%s367 + $0xac] sm:$0xf]
        %v589 = vld [vmem:[%s367 + $0xb0] sm:$0xf]
        %v590 = vld [vmem:[%s367 + $0xb4] sm:$0xf]
        %v591 = vld [vmem:[%s367 + $0xb8] sm:$0xf]
        %v592 = vld [vmem:[%s367 + $0xbc] sm:$0xf]
        %v593 = vld [vmem:[%s367 + $0xc0] sm:$0xf]
        %v594 = vld [vmem:[%s367 + $0xc4] sm:$0xf]
        %v595 = vld [vmem:[%s367 + $0xc8] sm:$0xf]
        %v596 = vld [vmem:[%s367 + $0xcc] sm:$0xf]
        %v597 = vld [vmem:[%s367 + $0xd0] sm:$0xf]
        %v598 = vld [vmem:[%s367 + $0xd4] sm:$0xf]
        %v599 = vld [vmem:[%s367 + $0xd8] sm:$0xf]
        %v600 = vld [vmem:[%s367 + $0xdc] sm:$0xf]
        %v601 = vld [vmem:[%s367 + $0xe0] sm:$0xf]
        %v602 = vld [vmem:[%s367 + $0xe4] sm:$0xf]
        %v603 = vld [vmem:[%s367 + $0xe8] sm:$0xf]
        %v604 = vld [vmem:[%s367 + $0xec] sm:$0xf]
        %v605 = vld [vmem:[%s367 + $0xf0] sm:$0xf]
        %v606 = vld [vmem:[%s367 + $0xf4] sm:$0xf]
        %v607 = vld [vmem:[%s367 + $0xf8] sm:$0xf]
        %v608 = vld [vmem:[%s367 + $0xfc] sm:$0xf]
        %v673 = vunpack.c.l.b16 %v481
        %v674 = vunpack.c.h.b16 %v481
        %v675 = vunpack.c.l.b16 %v482
        %v676 = vunpack.c.h.b16 %v482
        %v677 = vunpack.c.l.b16 %v483
        %v678 = vunpack.c.h.b16 %v483
        %v679 = vunpack.c.l.b16 %v484
        %v680 = vunpack.c.h.b16 %v484
        %v681 = vunpack.c.l.b16 %v485
        %v682 = vunpack.c.h.b16 %v485
        %v683 = vunpack.c.l.b16 %v486
        %v684 = vunpack.c.h.b16 %v486
        %v685 = vunpack.c.l.b16 %v487
        %v686 = vunpack.c.h.b16 %v487
        %v687 = vunpack.c.l.b16 %v488
        %v688 = vunpack.c.h.b16 %v488
        %v689 = vunpack.c.l.b16 %v489
        %v690 = vunpack.c.h.b16 %v489
        %v691 = vunpack.c.l.b16 %v490
        %v692 = vunpack.c.h.b16 %v490
        %v693 = vunpack.c.l.b16 %v491
        %v694 = vunpack.c.h.b16 %v491
        %v695 = vunpack.c.l.b16 %v492
        %v696 = vunpack.c.h.b16 %v492
        %v697 = vunpack.c.l.b16 %v493
        %v698 = vunpack.c.h.b16 %v493
        %v699 = vunpack.c.l.b16 %v494
        %v700 = vunpack.c.h.b16 %v494
        %v701 = vunpack.c.l.b16 %v495
        %v702 = vunpack.c.h.b16 %v495
        %v703 = vunpack.c.l.b16 %v496
        %v704 = vunpack.c.h.b16 %v496
        %v705 = vunpack.c.l.b16 %v497
        %v706 = vunpack.c.h.b16 %v497
        %v707 = vunpack.c.l.b16 %v498
        %v708 = vunpack.c.h.b16 %v498
        %v709 = vunpack.c.l.b16 %v499
        %v710 = vunpack.c.h.b16 %v499
        %v711 = vunpack.c.l.b16 %v500
        %v712 = vunpack.c.h.b16 %v500
        %v713 = vunpack.c.l.b16 %v501
        %v714 = vunpack.c.h.b16 %v501
        %v715 = vunpack.c.l.b16 %v502
        %v716 = vunpack.c.h.b16 %v502
        %v717 = vunpack.c.l.b16 %v503
        %v718 = vunpack.c.h.b16 %v503
        %v719 = vunpack.c.l.b16 %v504
        %v720 = vunpack.c.h.b16 %v504
        %v721 = vunpack.c.l.b16 %v505
        %v722 = vunpack.c.h.b16 %v505
        %v723 = vunpack.c.l.b16 %v506
        %v724 = vunpack.c.h.b16 %v506
        %v725 = vunpack.c.l.b16 %v507
        %v726 = vunpack.c.h.b16 %v507
        %v727 = vunpack.c.l.b16 %v508
        %v728 = vunpack.c.h.b16 %v508
        %v729 = vunpack.c.l.b16 %v509
        %v730 = vunpack.c.h.b16 %v509
        %v731 = vunpack.c.l.b16 %v510
        %v732 = vunpack.c.h.b16 %v510
        %v733 = vunpack.c.l.b16 %v511
        %v734 = vunpack.c.h.b16 %v511
        %v735 = vunpack.c.l.b16 %v512
        %v736 = vunpack.c.h.b16 %v512
        %v737 = vunpack.c.l.b16 %v513
        %v738 = vunpack.c.h.b16 %v513
        %v739 = vunpack.c.l.b16 %v514
        %v740 = vunpack.c.h.b16 %v514
        %v741 = vunpack.c.l.b16 %v515
        %v742 = vunpack.c.h.b16 %v515
        %v743 = vunpack.c.l.b16 %v516
        %v744 = vunpack.c.h.b16 %v516
        %v745 = vunpack.c.l.b16 %v517
        %v746 = vunpack.c.h.b16 %v517
        %v747 = vunpack.c.l.b16 %v518
        %v748 = vunpack.c.h.b16 %v518
        %v749 = vunpack.c.l.b16 %v519
        %v750 = vunpack.c.h.b16 %v519
        %v751 = vunpack.c.l.b16 %v520
        %v752 = vunpack.c.h.b16 %v520
        %v753 = vunpack.c.l.b16 %v521
        %v754 = vunpack.c.h.b16 %v521
        %v755 = vunpack.c.l.b16 %v522
        %v756 = vunpack.c.h.b16 %v522
        %v757 = vunpack.c.l.b16 %v523
        %v758 = vunpack.c.h.b16 %v523
        %v759 = vunpack.c.l.b16 %v524
        %v760 = vunpack.c.h.b16 %v524
        %v761 = vunpack.c.l.b16 %v525
        %v762 = vunpack.c.h.b16 %v525
        %v763 = vunpack.c.l.b16 %v526
        %v764 = vunpack.c.h.b16 %v526
        %v765 = vunpack.c.l.b16 %v527
        %v766 = vunpack.c.h.b16 %v527
        %v767 = vunpack.c.l.b16 %v528
        %v768 = vunpack.c.h.b16 %v528
        %v769 = vunpack.c.l.b16 %v529
        %v770 = vunpack.c.h.b16 %v529
        %v771 = vunpack.c.l.b16 %v530
        %v772 = vunpack.c.h.b16 %v530
        %v773 = vunpack.c.l.b16 %v531
        %v774 = vunpack.c.h.b16 %v531
        %v775 = vunpack.c.l.b16 %v532
        %v776 = vunpack.c.h.b16 %v532
        %v777 = vunpack.c.l.b16 %v533
        %v778 = vunpack.c.h.b16 %v533
        %v779 = vunpack.c.l.b16 %v534
        %v780 = vunpack.c.h.b16 %v534
        %v781 = vunpack.c.l.b16 %v535
        %v782 = vunpack.c.h.b16 %v535
        %v783 = vunpack.c.l.b16 %v536
        %v784 = vunpack.c.h.b16 %v536
        %v785 = vunpack.c.l.b16 %v537
        %v786 = vunpack.c.h.b16 %v537
        %v787 = vunpack.c.l.b16 %v538
        %v788 = vunpack.c.h.b16 %v538
        %v789 = vunpack.c.l.b16 %v539
        %v790 = vunpack.c.h.b16 %v539
        %v791 = vunpack.c.l.b16 %v540
        %v792 = vunpack.c.h.b16 %v540
        %v793 = vunpack.c.l.b16 %v541
        %v794 = vunpack.c.h.b16 %v541
        %v795 = vunpack.c.l.b16 %v542
        %v796 = vunpack.c.h.b16 %v542
        %v797 = vunpack.c.l.b16 %v543
        %v798 = vunpack.c.h.b16 %v543
        %v799 = vunpack.c.l.b16 %v544
        %v800 = vunpack.c.h.b16 %v544
        %v801 = vpack.c.b16 %v677, %v673
        %v802 = vpack.c.b16 %v678, %v674
        %v803 = vpack.c.b16 %v679, %v675
        %v804 = vpack.c.b16 %v680, %v676
        %v805 = vpack.c.b16 %v685, %v681
        %v806 = vpack.c.b16 %v686, %v682
        %v807 = vpack.c.b16 %v687, %v683
        %v808 = vpack.c.b16 %v688, %v684
        %v809 = vpack.c.b16 %v693, %v689
        %v810 = vpack.c.b16 %v694, %v690
        %v811 = vpack.c.b16 %v695, %v691
        %v812 = vpack.c.b16 %v696, %v692
        %v813 = vpack.c.b16 %v701, %v697
        %v814 = vpack.c.b16 %v702, %v698
        %v815 = vpack.c.b16 %v703, %v699
        %v816 = vpack.c.b16 %v704, %v700
        %v817 = vpack.c.b16 %v709, %v705
        %v818 = vpack.c.b16 %v710, %v706
        %v819 = vpack.c.b16 %v711, %v707
        %v820 = vpack.c.b16 %v712, %v708
        %v821 = vpack.c.b16 %v717, %v713
        %v822 = vpack.c.b16 %v718, %v714
        %v823 = vpack.c.b16 %v719, %v715
        %v824 = vpack.c.b16 %v720, %v716
        %v825 = vpack.c.b16 %v725, %v721
        %v826 = vpack.c.b16 %v726, %v722
        %v827 = vpack.c.b16 %v727, %v723
        %v828 = vpack.c.b16 %v728, %v724
        %v829 = vpack.c.b16 %v733, %v729
        %v830 = vpack.c.b16 %v734, %v730
        %v831 = vpack.c.b16 %v735, %v731
        %v832 = vpack.c.b16 %v736, %v732
        %v833 = vpack.c.b16 %v741, %v737
        %v834 = vpack.c.b16 %v742, %v738
        %v835 = vpack.c.b16 %v743, %v739
        %v836 = vpack.c.b16 %v744, %v740
        %v837 = vpack.c.b16 %v749, %v745
        %v838 = vpack.c.b16 %v750, %v746
        %v839 = vpack.c.b16 %v751, %v747
        %v840 = vpack.c.b16 %v752, %v748
        %v841 = vpack.c.b16 %v757, %v753
        %v842 = vpack.c.b16 %v758, %v754
        %v843 = vpack.c.b16 %v759, %v755
        %v844 = vpack.c.b16 %v760, %v756
        %v845 = vpack.c.b16 %v765, %v761
        %v846 = vpack.c.b16 %v766, %v762
        %v847 = vpack.c.b16 %v767, %v763
        %v848 = vpack.c.b16 %v768, %v764
        %v849 = vpack.c.b16 %v773, %v769
        %v850 = vpack.c.b16 %v774, %v770
        %v851 = vpack.c.b16 %v775, %v771
        %v852 = vpack.c.b16 %v776, %v772
        %v853 = vpack.c.b16 %v781, %v777
        %v854 = vpack.c.b16 %v782, %v778
        %v855 = vpack.c.b16 %v783, %v779
        %v856 = vpack.c.b16 %v784, %v780
        %v857 = vpack.c.b16 %v789, %v785
        %v858 = vpack.c.b16 %v790, %v786
        %v859 = vpack.c.b16 %v791, %v787
        %v860 = vpack.c.b16 %v792, %v788
        %v861 = vpack.c.b16 %v797, %v793
        %v862 = vpack.c.b16 %v798, %v794
        %v863 = vpack.c.b16 %v799, %v795
        %v864 = vpack.c.b16 %v800, %v796
        %v993 = vunpack.c.l.b16 %v545
        %v994 = vunpack.c.l.b16 %v546
        %v995 = vunpack.c.l.b16 %v547
        %v996 = vunpack.c.l.b16 %v548
        %v997 = vunpack.c.l.b16 %v549
        %v998 = vunpack.c.l.b16 %v550
        %v999 = vunpack.c.l.b16 %v551
        %v1000 = vunpack.c.l.b16 %v552
        %v1001 = vunpack.c.l.b16 %v553
        %v1002 = vunpack.c.l.b16 %v554
        %v1003 = vunpack.c.l.b16 %v555
        %v1004 = vunpack.c.l.b16 %v556
        %v1005 = vunpack.c.l.b16 %v557
        %v1006 = vunpack.c.l.b16 %v558
        %v1007 = vunpack.c.l.b16 %v559
        %v1008 = vunpack.c.l.b16 %v560
        %v1009 = vunpack.c.l.b16 %v561
        %v1010 = vunpack.c.l.b16 %v562
        %v1011 = vunpack.c.l.b16 %v563
        %v1012 = vunpack.c.l.b16 %v564
        %v1013 = vunpack.c.l.b16 %v565
        %v1014 = vunpack.c.l.b16 %v566
        %v1015 = vunpack.c.l.b16 %v567
        %v1016 = vunpack.c.l.b16 %v568
        %v1017 = vunpack.c.l.b16 %v569
        %v1018 = vunpack.c.l.b16 %v570
        %v1019 = vunpack.c.l.b16 %v571
        %v1020 = vunpack.c.l.b16 %v572
        %v1021 = vunpack.c.l.b16 %v573
        %v1022 = vunpack.c.l.b16 %v574
        %v1023 = vunpack.c.l.b16 %v575
        %v1024 = vunpack.c.l.b16 %v576
        %v1025 = vunpack.c.l.b16 %v577
        %v1026 = vunpack.c.l.b16 %v578
        %v1027 = vunpack.c.l.b16 %v579
        %v1028 = vunpack.c.l.b16 %v580
        %v1029 = vunpack.c.l.b16 %v581
        %v1030 = vunpack.c.l.b16 %v582
        %v1031 = vunpack.c.l.b16 %v583
        %v1032 = vunpack.c.l.b16 %v584
        %v1033 = vunpack.c.l.b16 %v585
        %v1034 = vunpack.c.l.b16 %v586
        %v1035 = vunpack.c.l.b16 %v587
        %v1036 = vunpack.c.l.b16 %v588
        %v1037 = vunpack.c.l.b16 %v589
        %v1038 = vunpack.c.l.b16 %v590
        %v1039 = vunpack.c.l.b16 %v591
        %v1040 = vunpack.c.l.b16 %v592
        %v1041 = vunpack.c.l.b16 %v593
        %v1042 = vunpack.c.l.b16 %v594
        %v1043 = vunpack.c.l.b16 %v595
        %v1044 = vunpack.c.l.b16 %v596
        %v1045 = vunpack.c.l.b16 %v597
        %v1046 = vunpack.c.l.b16 %v598
        %v1047 = vunpack.c.l.b16 %v599
        %v1048 = vunpack.c.l.b16 %v600
        %v1049 = vunpack.c.l.b16 %v601
        %v1050 = vunpack.c.l.b16 %v602
        %v1051 = vunpack.c.l.b16 %v603
        %v1052 = vunpack.c.l.b16 %v604
        %v1053 = vunpack.c.l.b16 %v605
        %v1054 = vunpack.c.l.b16 %v606
        %v1055 = vunpack.c.l.b16 %v607
        %v1056 = vunpack.c.l.b16 %v608
        %v1057 = vpack.c.b16 %v994, %v993
        %v1058 = vpack.c.b16 %v996, %v995
        %v1059 = vpack.c.b16 %v998, %v997
        %v1060 = vpack.c.b16 %v1000, %v999
        %v1061 = vpack.c.b16 %v1002, %v1001
        %v1062 = vpack.c.b16 %v1004, %v1003
        %v1063 = vpack.c.b16 %v1006, %v1005
        %v1064 = vpack.c.b16 %v1008, %v1007
        %v1065 = vpack.c.b16 %v1010, %v1009
        %v1066 = vpack.c.b16 %v1012, %v1011
        %v1067 = vpack.c.b16 %v1014, %v1013
        %v1068 = vpack.c.b16 %v1016, %v1015
        %v1069 = vpack.c.b16 %v1018, %v1017
        %v1070 = vpack.c.b16 %v1020, %v1019
        %v1071 = vpack.c.b16 %v1022, %v1021
        %v1072 = vpack.c.b16 %v1024, %v1023
        %v1073 = vpack.c.b16 %v1026, %v1025
        %v1074 = vpack.c.b16 %v1028, %v1027
        %v1075 = vpack.c.b16 %v1030, %v1029
        %v1076 = vpack.c.b16 %v1032, %v1031
        %v1077 = vpack.c.b16 %v1034, %v1033
        %v1078 = vpack.c.b16 %v1036, %v1035
        %v1079 = vpack.c.b16 %v1038, %v1037
        %v1080 = vpack.c.b16 %v1040, %v1039
        %v1081 = vpack.c.b16 %v1042, %v1041
        %v1082 = vpack.c.b16 %v1044, %v1043
        %v1083 = vpack.c.b16 %v1046, %v1045
        %v1084 = vpack.c.b16 %v1048, %v1047
        %v1085 = vpack.c.b16 %v1050, %v1049
        %v1086 = vpack.c.b16 %v1052, %v1051
        %v1087 = vpack.c.b16 %v1054, %v1053
        %v1088 = vpack.c.b16 %v1056, %v1055
        %1121 = vmatpush.bf16.msra.mxu0 %v1064
        %1122 = vmatpush.bf16.msra.mxu0 %v1063
        %1123 = vmatpush.bf16.msra.mxu0 %v1062
        %1124 = vmatpush.bf16.msra.mxu0 %v1061
        %1125 = vmatpush.bf16.msra.mxu0 %v1060
        %1126 = vmatpush.bf16.msra.mxu0 %v1059
        %1127 = vmatpush.bf16.msra.mxu0 %v1058
        %1128 = vmatpush.bf16.msra.mxu0 %v1057
        %1129 = vmatmul.bf16.gmra.mxu0 %v801
        %v1130 = vpop.f32.mrf.mxu0
        %v1131 = vadd.f32 0.0, %v1130
        %v1132 = vpop.f32.mrf.mxu0
        %v1133 = vadd.f32 0.0, %v1132
        %1134 = vmatmul.bf16.gmra.mxu0 %v805
        %v1135 = vpop.f32.mrf.mxu0
        %v1136 = vadd.f32 0.0, %v1135
        %v1137 = vpop.f32.mrf.mxu0
        %v1138 = vadd.f32 0.0, %v1137
        %1139 = vmatmul.bf16.gmra.mxu0 %v809
        %v1140 = vpop.f32.mrf.mxu0
        %v1141 = vadd.f32 0.0, %v1140
        %v1142 = vpop.f32.mrf.mxu0
        %v1143 = vadd.f32 0.0, %v1142
        %1144 = vmatmul.bf16.gmra.mxu0 %v813
        %v1145 = vpop.f32.mrf.mxu0
        %v1146 = vadd.f32 0.0, %v1145
        %v1147 = vpop.f32.mrf.mxu0
        %v1148 = vadd.f32 0.0, %v1147
        %1149 = vmatmul.bf16.gmra.mxu0 %v817
        %v1150 = vpop.f32.mrf.mxu0
        %v1151 = vadd.f32 0.0, %v1150
        %v1152 = vpop.f32.mrf.mxu0
        %v1153 = vadd.f32 0.0, %v1152
        %1154 = vmatmul.bf16.gmra.mxu0 %v821
        %v1155 = vpop.f32.mrf.mxu0
        %v1156 = vadd.f32 0.0, %v1155
        %v1157 = vpop.f32.mrf.mxu0
        %v1158 = vadd.f32 0.0, %v1157
        %1159 = vmatmul.bf16.gmra.mxu0 %v825
        %v1160 = vpop.f32.mrf.mxu0
        %v1161 = vadd.f32 0.0, %v1160
        %v1162 = vpop.f32.mrf.mxu0
        %v1163 = vadd.f32 0.0, %v1162
        %1164 = vmatmul.bf16.gmra.mxu0 %v829
        %v1165 = vpop.f32.mrf.mxu0
        %v1166 = vadd.f32 0.0, %v1165
        %v1167 = vpop.f32.mrf.mxu0
        %v1168 = vadd.f32 0.0, %v1167
        %1169 = vmatmul.bf16.gmra.mxu0 %v833
        %v1170 = vpop.f32.mrf.mxu0
        %v1171 = vadd.f32 0.0, %v1170
        %v1172 = vpop.f32.mrf.mxu0
        %v1173 = vadd.f32 0.0, %v1172
        %1174 = vmatmul.bf16.gmra.mxu0 %v837
        %v1175 = vpop.f32.mrf.mxu0
        %v1176 = vadd.f32 0.0, %v1175
        %v1177 = vpop.f32.mrf.mxu0
        %v1178 = vadd.f32 0.0, %v1177
        %1179 = vmatmul.bf16.gmra.mxu0 %v841
        %v1180 = vpop.f32.mrf.mxu0
        %v1181 = vadd.f32 0.0, %v1180
        %v1182 = vpop.f32.mrf.mxu0
        %v1183 = vadd.f32 0.0, %v1182
        %1184 = vmatmul.bf16.gmra.mxu0 %v845
        %v1185 = vpop.f32.mrf.mxu0
        %v1186 = vadd.f32 0.0, %v1185
        %v1187 = vpop.f32.mrf.mxu0
        %v1188 = vadd.f32 0.0, %v1187
        %1189 = vmatmul.bf16.gmra.mxu0 %v849
        %v1190 = vpop.f32.mrf.mxu0
        %v1191 = vadd.f32 0.0, %v1190
        %v1192 = vpop.f32.mrf.mxu0
        %v1193 = vadd.f32 0.0, %v1192
        %1194 = vmatmul.bf16.gmra.mxu0 %v853
        %v1195 = vpop.f32.mrf.mxu0
        %v1196 = vadd.f32 0.0, %v1195
        %v1197 = vpop.f32.mrf.mxu0
        %v1198 = vadd.f32 0.0, %v1197
        %1199 = vmatmul.bf16.gmra.mxu0 %v857
        %v1200 = vpop.f32.mrf.mxu0
        %v1201 = vadd.f32 0.0, %v1200
        %v1202 = vpop.f32.mrf.mxu0
        %v1203 = vadd.f32 0.0, %v1202
        %1204 = vmatmul.bf16.gmra.mxu0 %v861
        %v1205 = vpop.f32.mrf.mxu0
        %v1206 = vadd.f32 0.0, %v1205
        %v1207 = vpop.f32.mrf.mxu0
        %v1208 = vadd.f32 0.0, %v1207
        %1209 = vdwg.mxu0
        %1210 = vmatpush.bf16.msra.mxu0 %v1072
        %1211 = vmatpush.bf16.msra.mxu0 %v1071
        %1212 = vmatpush.bf16.msra.mxu0 %v1070
        %1213 = vmatpush.bf16.msra.mxu0 %v1069
        %1214 = vmatpush.bf16.msra.mxu0 %v1068
        %1215 = vmatpush.bf16.msra.mxu0 %v1067
        %1216 = vmatpush.bf16.msra.mxu0 %v1066
        %1217 = vmatpush.bf16.msra.mxu0 %v1065
        %1218 = vmatmul.bf16.gmra.mxu0 %v802
        %v1219 = vpop.f32.mrf.mxu0
        %v1220 = vadd.f32 %v1131, %v1219
        %v1221 = vpop.f32.mrf.mxu0
        %v1222 = vadd.f32 %v1133, %v1221
        %1223 = vmatmul.bf16.gmra.mxu0 %v806
        %v1224 = vpop.f32.mrf.mxu0
        %v1225 = vadd.f32 %v1136, %v1224
        %v1226 = vpop.f32.mrf.mxu0
        %v1227 = vadd.f32 %v1138, %v1226
        %1228 = vmatmul.bf16.gmra.mxu0 %v810
        %v1229 = vpop.f32.mrf.mxu0
        %v1230 = vadd.f32 %v1141, %v1229
        %v1231 = vpop.f32.mrf.mxu0
        %v1232 = vadd.f32 %v1143, %v1231
        %1233 = vmatmul.bf16.gmra.mxu0 %v814
        %v1234 = vpop.f32.mrf.mxu0
        %v1235 = vadd.f32 %v1146, %v1234
        %v1236 = vpop.f32.mrf.mxu0
        %v1237 = vadd.f32 %v1148, %v1236
        %1238 = vmatmul.bf16.gmra.mxu0 %v818
        %v1239 = vpop.f32.mrf.mxu0
        %v1240 = vadd.f32 %v1151, %v1239
        %v1241 = vpop.f32.mrf.mxu0
        %v1242 = vadd.f32 %v1153, %v1241
        %1243 = vmatmul.bf16.gmra.mxu0 %v822
        %v1244 = vpop.f32.mrf.mxu0
        %v1245 = vadd.f32 %v1156, %v1244
        %v1246 = vpop.f32.mrf.mxu0
        %v1247 = vadd.f32 %v1158, %v1246
        %1248 = vmatmul.bf16.gmra.mxu0 %v826
        %v1249 = vpop.f32.mrf.mxu0
        %v1250 = vadd.f32 %v1161, %v1249
        %v1251 = vpop.f32.mrf.mxu0
        %v1252 = vadd.f32 %v1163, %v1251
        %1253 = vmatmul.bf16.gmra.mxu0 %v830
        %v1254 = vpop.f32.mrf.mxu0
        %v1255 = vadd.f32 %v1166, %v1254
        %v1256 = vpop.f32.mrf.mxu0
        %v1257 = vadd.f32 %v1168, %v1256
        %1258 = vmatmul.bf16.gmra.mxu0 %v834
        %v1259 = vpop.f32.mrf.mxu0
        %v1260 = vadd.f32 %v1171, %v1259
        %v1261 = vpop.f32.mrf.mxu0
        %v1262 = vadd.f32 %v1173, %v1261
        %1263 = vmatmul.bf16.gmra.mxu0 %v838
        %v1264 = vpop.f32.mrf.mxu0
        %v1265 = vadd.f32 %v1176, %v1264
        %v1266 = vpop.f32.mrf.mxu0
        %v1267 = vadd.f32 %v1178, %v1266
        %1268 = vmatmul.bf16.gmra.mxu0 %v842
        %v1269 = vpop.f32.mrf.mxu0
        %v1270 = vadd.f32 %v1181, %v1269
        %v1271 = vpop.f32.mrf.mxu0
        %v1272 = vadd.f32 %v1183, %v1271
        %1273 = vmatmul.bf16.gmra.mxu0 %v846
        %v1274 = vpop.f32.mrf.mxu0
        %v1275 = vadd.f32 %v1186, %v1274
        %v1276 = vpop.f32.mrf.mxu0
        %v1277 = vadd.f32 %v1188, %v1276
        %1278 = vmatmul.bf16.gmra.mxu0 %v850
        %v1279 = vpop.f32.mrf.mxu0
        %v1280 = vadd.f32 %v1191, %v1279
        %v1281 = vpop.f32.mrf.mxu0
        %v1282 = vadd.f32 %v1193, %v1281
        %1283 = vmatmul.bf16.gmra.mxu0 %v854
        %v1284 = vpop.f32.mrf.mxu0
        %v1285 = vadd.f32 %v1196, %v1284
        %v1286 = vpop.f32.mrf.mxu0
        %v1287 = vadd.f32 %v1198, %v1286
        %1288 = vmatmul.bf16.gmra.mxu0 %v858
        %v1289 = vpop.f32.mrf.mxu0
        %v1290 = vadd.f32 %v1201, %v1289
        %v1291 = vpop.f32.mrf.mxu0
        %v1292 = vadd.f32 %v1203, %v1291
        %1293 = vmatmul.bf16.gmra.mxu0 %v862
        %v1294 = vpop.f32.mrf.mxu0
        %v1295 = vadd.f32 %v1206, %v1294
        %v1296 = vpop.f32.mrf.mxu0
        %v1297 = vadd.f32 %v1208, %v1296
        %1298 = vdwg.mxu0
        %1299 = vmatpush.bf16.msra.mxu0 %v1080
        %1300 = vmatpush.bf16.msra.mxu0 %v1079
        %1301 = vmatpush.bf16.msra.mxu0 %v1078
        %1302 = vmatpush.bf16.msra.mxu0 %v1077
        %1303 = vmatpush.bf16.msra.mxu0 %v1076
        %1304 = vmatpush.bf16.msra.mxu0 %v1075
        %1305 = vmatpush.bf16.msra.mxu0 %v1074
        %1306 = vmatpush.bf16.msra.mxu0 %v1073
        %1307 = vmatmul.bf16.gmra.mxu0 %v803
        %v1308 = vpop.f32.mrf.mxu0
        %v1309 = vadd.f32 %v1220, %v1308
        %v1310 = vpop.f32.mrf.mxu0
        %v1311 = vadd.f32 %v1222, %v1310
        %1312 = vmatmul.bf16.gmra.mxu0 %v807
        %v1313 = vpop.f32.mrf.mxu0
        %v1314 = vadd.f32 %v1225, %v1313
        %v1315 = vpop.f32.mrf.mxu0
        %v1316 = vadd.f32 %v1227, %v1315
        %1317 = vmatmul.bf16.gmra.mxu0 %v811
        %v1318 = vpop.f32.mrf.mxu0
        %v1319 = vadd.f32 %v1230, %v1318
        %v1320 = vpop.f32.mrf.mxu0
        %v1321 = vadd.f32 %v1232, %v1320
        %1322 = vmatmul.bf16.gmra.mxu0 %v815
        %v1323 = vpop.f32.mrf.mxu0
        %v1324 = vadd.f32 %v1235, %v1323
        %v1325 = vpop.f32.mrf.mxu0
        %v1326 = vadd.f32 %v1237, %v1325
        %1327 = vmatmul.bf16.gmra.mxu0 %v819
        %v1328 = vpop.f32.mrf.mxu0
        %v1329 = vadd.f32 %v1240, %v1328
        %v1330 = vpop.f32.mrf.mxu0
        %v1331 = vadd.f32 %v1242, %v1330
        %1332 = vmatmul.bf16.gmra.mxu0 %v823
        %v1333 = vpop.f32.mrf.mxu0
        %v1334 = vadd.f32 %v1245, %v1333
        %v1335 = vpop.f32.mrf.mxu0
        %v1336 = vadd.f32 %v1247, %v1335
        %1337 = vmatmul.bf16.gmra.mxu0 %v827
        %v1338 = vpop.f32.mrf.mxu0
        %v1339 = vadd.f32 %v1250, %v1338
        %v1340 = vpop.f32.mrf.mxu0
        %v1341 = vadd.f32 %v1252, %v1340
        %1342 = vmatmul.bf16.gmra.mxu0 %v831
        %v1343 = vpop.f32.mrf.mxu0
        %v1344 = vadd.f32 %v1255, %v1343
        %v1345 = vpop.f32.mrf.mxu0
        %v1346 = vadd.f32 %v1257, %v1345
        %1347 = vmatmul.bf16.gmra.mxu0 %v835
        %v1348 = vpop.f32.mrf.mxu0
        %v1349 = vadd.f32 %v1260, %v1348
        %v1350 = vpop.f32.mrf.mxu0
        %v1351 = vadd.f32 %v1262, %v1350
        %1352 = vmatmul.bf16.gmra.mxu0 %v839
        %v1353 = vpop.f32.mrf.mxu0
        %v1354 = vadd.f32 %v1265, %v1353
        %v1355 = vpop.f32.mrf.mxu0
        %v1356 = vadd.f32 %v1267, %v1355
        %1357 = vmatmul.bf16.gmra.mxu0 %v843
        %v1358 = vpop.f32.mrf.mxu0
        %v1359 = vadd.f32 %v1270, %v1358
        %v1360 = vpop.f32.mrf.mxu0
        %v1361 = vadd.f32 %v1272, %v1360
        %1362 = vmatmul.bf16.gmra.mxu0 %v847
        %v1363 = vpop.f32.mrf.mxu0
        %v1364 = vadd.f32 %v1275, %v1363
        %v1365 = vpop.f32.mrf.mxu0
        %v1366 = vadd.f32 %v1277, %v1365
        %1367 = vmatmul.bf16.gmra.mxu0 %v851
        %v1368 = vpop.f32.mrf.mxu0
        %v1369 = vadd.f32 %v1280, %v1368
        %v1370 = vpop.f32.mrf.mxu0
        %v1371 = vadd.f32 %v1282, %v1370
        %1372 = vmatmul.bf16.gmra.mxu0 %v855
        %v1373 = vpop.f32.mrf.mxu0
        %v1374 = vadd.f32 %v1285, %v1373
        %v1375 = vpop.f32.mrf.mxu0
        %v1376 = vadd.f32 %v1287, %v1375
        %1377 = vmatmul.bf16.gmra.mxu0 %v859
        %v1378 = vpop.f32.mrf.mxu0
        %v1379 = vadd.f32 %v1290, %v1378
        %v1380 = vpop.f32.mrf.mxu0
        %v1381 = vadd.f32 %v1292, %v1380
        %1382 = vmatmul.bf16.gmra.mxu0 %v863
        %v1383 = vpop.f32.mrf.mxu0
        %v1384 = vadd.f32 %v1295, %v1383
        %v1385 = vpop.f32.mrf.mxu0
        %v1386 = vadd.f32 %v1297, %v1385
        %1387 = vdwg.mxu0
        %1388 = vmatpush.bf16.msra.mxu0 %v1088
        %1389 = vmatpush.bf16.msra.mxu0 %v1087
        %1390 = vmatpush.bf16.msra.mxu0 %v1086
        %1391 = vmatpush.bf16.msra.mxu0 %v1085
        %1392 = vmatpush.bf16.msra.mxu0 %v1084
        %1393 = vmatpush.bf16.msra.mxu0 %v1083
        %1394 = vmatpush.bf16.msra.mxu0 %v1082
        %1395 = vmatpush.bf16.msra.mxu0 %v1081
        %1396 = vmatmul.bf16.gmra.mxu0 %v804
        %v1397 = vpop.f32.mrf.mxu0
        %v1398 = vadd.f32 %v1309, %v1397
        %v1399 = vpop.f32.mrf.mxu0
        %v1400 = vadd.f32 %v1311, %v1399
        %1401 = vmatmul.bf16.gmra.mxu0 %v808
        %v1402 = vpop.f32.mrf.mxu0
        %v1403 = vadd.f32 %v1314, %v1402
        %v1404 = vpop.f32.mrf.mxu0
        %v1405 = vadd.f32 %v1316, %v1404
        %1406 = vmatmul.bf16.gmra.mxu0 %v812
        %v1407 = vpop.f32.mrf.mxu0
        %v1408 = vadd.f32 %v1319, %v1407
        %v1409 = vpop.f32.mrf.mxu0
        %v1410 = vadd.f32 %v1321, %v1409
        %1411 = vmatmul.bf16.gmra.mxu0 %v816
        %v1412 = vpop.f32.mrf.mxu0
        %v1413 = vadd.f32 %v1324, %v1412
        %v1414 = vpop.f32.mrf.mxu0
        %v1415 = vadd.f32 %v1326, %v1414
        %1416 = vmatmul.bf16.gmra.mxu0 %v820
        %v1417 = vpop.f32.mrf.mxu0
        %v1418 = vadd.f32 %v1329, %v1417
        %v1419 = vpop.f32.mrf.mxu0
        %v1420 = vadd.f32 %v1331, %v1419
        %1421 = vmatmul.bf16.gmra.mxu0 %v824
        %v1422 = vpop.f32.mrf.mxu0
        %v1423 = vadd.f32 %v1334, %v1422
        %v1424 = vpop.f32.mrf.mxu0
        %v1425 = vadd.f32 %v1336, %v1424
        %1426 = vmatmul.bf16.gmra.mxu0 %v828
        %v1427 = vpop.f32.mrf.mxu0
        %v1428 = vadd.f32 %v1339, %v1427
        %v1429 = vpop.f32.mrf.mxu0
        %v1430 = vadd.f32 %v1341, %v1429
        %1431 = vmatmul.bf16.gmra.mxu0 %v832
        %v1432 = vpop.f32.mrf.mxu0
        %v1433 = vadd.f32 %v1344, %v1432
        %v1434 = vpop.f32.mrf.mxu0
        %v1435 = vadd.f32 %v1346, %v1434
        %1436 = vmatmul.bf16.gmra.mxu0 %v836
        %v1437 = vpop.f32.mrf.mxu0
        %v1438 = vadd.f32 %v1349, %v1437
        %v1439 = vpop.f32.mrf.mxu0
        %v1440 = vadd.f32 %v1351, %v1439
        %1441 = vmatmul.bf16.gmra.mxu0 %v840
        %v1442 = vpop.f32.mrf.mxu0
        %v1443 = vadd.f32 %v1354, %v1442
        %v1444 = vpop.f32.mrf.mxu0
        %v1445 = vadd.f32 %v1356, %v1444
        %1446 = vmatmul.bf16.gmra.mxu0 %v844
        %v1447 = vpop.f32.mrf.mxu0
        %v1448 = vadd.f32 %v1359, %v1447
        %v1449 = vpop.f32.mrf.mxu0
        %v1450 = vadd.f32 %v1361, %v1449
        %1451 = vmatmul.bf16.gmra.mxu0 %v848
        %v1452 = vpop.f32.mrf.mxu0
        %v1453 = vadd.f32 %v1364, %v1452
        %v1454 = vpop.f32.mrf.mxu0
        %v1455 = vadd.f32 %v1366, %v1454
        %1456 = vmatmul.bf16.gmra.mxu0 %v852
        %v1457 = vpop.f32.mrf.mxu0
        %v1458 = vadd.f32 %v1369, %v1457
        %v1459 = vpop.f32.mrf.mxu0
        %v1460 = vadd.f32 %v1371, %v1459
        %1461 = vmatmul.bf16.gmra.mxu0 %v856
        %v1462 = vpop.f32.mrf.mxu0
        %v1463 = vadd.f32 %v1374, %v1462
        %v1464 = vpop.f32.mrf.mxu0
        %v1465 = vadd.f32 %v1376, %v1464
        %1466 = vmatmul.bf16.gmra.mxu0 %v860
        %v1467 = vpop.f32.mrf.mxu0
        %v1468 = vadd.f32 %v1379, %v1467
        %v1469 = vpop.f32.mrf.mxu0
        %v1470 = vadd.f32 %v1381, %v1469
        %1471 = vmatmul.bf16.gmra.mxu0 %v864
        %v1472 = vpop.f32.mrf.mxu0
        %v1473 = vadd.f32 %v1384, %v1472
        %v1474 = vpop.f32.mrf.mxu0
        %v1475 = vadd.f32 %v1386, %v1474
        %1476 = vdwg.mxu0
        %v1477 = vadd.f32 %v449, %v1398
        %v1478 = vadd.f32 %v450, %v1400
        %v1479 = vadd.f32 %v451, %v1403
        %v1480 = vadd.f32 %v452, %v1405
        %v1481 = vadd.f32 %v453, %v1408
        %v1482 = vadd.f32 %v454, %v1410
        %v1483 = vadd.f32 %v455, %v1413
        %v1484 = vadd.f32 %v456, %v1415
        %v1485 = vadd.f32 %v457, %v1418
        %v1486 = vadd.f32 %v458, %v1420
        %v1487 = vadd.f32 %v459, %v1423
        %v1488 = vadd.f32 %v460, %v1425
        %v1489 = vadd.f32 %v461, %v1428
        %v1490 = vadd.f32 %v462, %v1430
        %v1491 = vadd.f32 %v463, %v1433
        %v1492 = vadd.f32 %v464, %v1435
        %v1493 = vadd.f32 %v465, %v1438
        %v1494 = vadd.f32 %v466, %v1440
        %v1495 = vadd.f32 %v467, %v1443
        %v1496 = vadd.f32 %v468, %v1445
        %v1497 = vadd.f32 %v469, %v1448
        %v1498 = vadd.f32 %v470, %v1450
        %v1499 = vadd.f32 %v471, %v1453
        %v1500 = vadd.f32 %v472, %v1455
        %v1501 = vadd.f32 %v473, %v1458
        %v1502 = vadd.f32 %v474, %v1460
        %v1503 = vadd.f32 %v475, %v1463
        %v1504 = vadd.f32 %v476, %v1465
        %v1505 = vadd.f32 %v477, %v1468
        %v1506 = vadd.f32 %v478, %v1470
        %v1507 = vadd.f32 %v479, %v1473
        %v1508 = vadd.f32 %v480, %v1475
        %1509 = vst [vmem:[%s379] sm:$0xff] %v1477
        %1510 = vst [vmem:[%s379 + $0x8] sm:$0xff] %v1478
        %1511 = vst [vmem:[%s379 + $0x10] sm:$0xff] %v1479
        %1512 = vst [vmem:[%s379 + $0x18] sm:$0xff] %v1480
        %1513 = vst [vmem:[%s379 + $0x20] sm:$0xff] %v1481
        %1514 = vst [vmem:[%s379 + $0x28] sm:$0xff] %v1482
        %1515 = vst [vmem:[%s379 + $0x30] sm:$0xff] %v1483
        %1516 = vst [vmem:[%s379 + $0x38] sm:$0xff] %v1484
        %1517 = vst [vmem:[%s379 + $0x40] sm:$0xff] %v1485
        %1518 = vst [vmem:[%s379 + $0x48] sm:$0xff] %v1486
        %1519 = vst [vmem:[%s379 + $0x50] sm:$0xff] %v1487
        %1520 = vst [vmem:[%s379 + $0x58] sm:$0xff] %v1488
        %1521 = vst [vmem:[%s379 + $0x60] sm:$0xff] %v1489
        %1522 = vst [vmem:[%s379 + $0x68] sm:$0xff] %v1490
        %1523 = vst [vmem:[%s379 + $0x70] sm:$0xff] %v1491
        %1524 = vst [vmem:[%s379 + $0x78] sm:$0xff] %v1492
        %1525 = vst [vmem:[%s379 + $0x80] sm:$0xff] %v1493
        %1526 = vst [vmem:[%s379 + $0x88] sm:$0xff] %v1494
        %1527 = vst [vmem:[%s379 + $0x90] sm:$0xff] %v1495
        %1528 = vst [vmem:[%s379 + $0x98] sm:$0xff] %v1496
        %1529 = vst [vmem:[%s379 + $0xa0] sm:$0xff] %v1497
        %1530 = vst [vmem:[%s379 + $0xa8] sm:$0xff] %v1498
        %1531 = vst [vmem:[%s379 + $0xb0] sm:$0xff] %v1499
        %1532 = vst [vmem:[%s379 + $0xb8] sm:$0xff] %v1500
        %1533 = vst [vmem:[%s379 + $0xc0] sm:$0xff] %v1501
        %1534 = vst [vmem:[%s379 + $0xc8] sm:$0xff] %v1502
        %1535 = vst [vmem:[%s379 + $0xd0] sm:$0xff] %v1503
        %1536 = vst [vmem:[%s379 + $0xd8] sm:$0xff] %v1504
        %1537 = vst [vmem:[%s379 + $0xe0] sm:$0xff] %v1505
        %1538 = vst [vmem:[%s379 + $0xe8] sm:$0xff] %v1506
        %1539 = vst [vmem:[%s379 + $0xf0] sm:$0xff] %v1507
        %1540 = vst [vmem:[%s379 + $0xf8] sm:$0xff] %v1508
        %s1541 = smul.u32 32, %s18
        %p1542 = scmp.lt.s32.totalorder %s1541, 127
        %s1543 = scalar_select %p1542, %s1541, 127
        %s1544 = smul.addr %s1543, 8
        %s1545 = scalar_lea.vmem %s3, %s1544
        // Predicated region
        $region60: #{sage_layer_pallas.3} parent=50 // pred_check
          %p1546 = pneg %p124
        $region61: #{sage_layer_pallas.3} parent=50 // pred_check_branch
          %1548 = sbr.rel (%p1546) target = $region63
        $region62: #{sage_layer_pallas.3} parent=50 // pred_region
          %s1549 = smul.u32 32, %s18
        $region63: #{sage_layer_pallas.3} parent=50 // pred_fallthru
          _
      $region51: #{sage_layer_pallas.3} parent=5 // pred_fallthru
        _
      %p1550 = scmp.le.s32.totalorder 2, %s9
      // Predicated region
      $region64: #{sage_layer_pallas.3} parent=5 // pred_check
        %p1551 = pneg %p1550
      $region65: #{sage_layer_pallas.3} parent=5 // pred_check_branch
        %1553 = sbr.rel (%p1551) target = $region67
      $region66: #{sage_layer_pallas.3} parent=5 // pred_region
        %s1554 = ssub.s32 %s9, 2
        // Predicated region
        $region68: #{sage_layer_pallas.3} parent=66 // pred_check
          %p1555 = pneg %p130
        $region69: #{sage_layer_pallas.3} parent=66 // pred_check_branch
          %1557 = sbr.rel (%p1555) target = $region71
        $region70: #{sage_layer_pallas.3} parent=66 // pred_region
          %s1558 = smul.u32 32, %s20
          %p1559 = scmp.lt.s32.totalorder %s1558, 127
          %s1560 = scalar_select %p1559, %s1558, 127
          %s1561 = smul.addr %s1560, 8
          %s1562 = scalar_lea.vmem %s3, %s1561
        $region71: #{sage_layer_pallas.3} parent=66 // pred_fallthru
          _
      $region67: #{sage_layer_pallas.3} parent=5 // pred_fallthru
        _
    $region6: #{sage_layer_pallas.3} parent=1 // loop_footer
      %s13 = sadd.s32 1, %s9
    $region7: #{sage_layer_pallas.3} parent=1 // loop_footer_branch
      %8 = sbr.rel target = $region3
    $region8: #{sage_layer_pallas.3} parent=1 // loop_exit
      _

</llo_original>
